<compile_context>
chip_gen: v7x
topology: tpu7x:2x2x1
jax: 0.10.0
libtpu: 0.0.40
codegen_flags: <defaults>
</compile_context>

<pallas_src>
import math

import jax
import jax.numpy as jnp
import numpy as np
from jax.experimental import pallas as pl
from jax.experimental.pallas import tpu as pltpu

# ---- model hyper-parameters (small, consistent with the module) ----
B = 2            # batch
C = 8            # after_reduced_cnn_size (sequence length for attention)
D = 32           # d_model (LayerNorm size)
H = 4            # number of heads
DH = D // H      # d_per_head
KSZ = 7          # causal conv kernel size
PAD = KSZ - 1    # causal left padding
G = 2 * B        # conv "groups": (key, b0), (key, b1), (value, b0), (value, b1)
GC = G * C       # 32
BC = B * C       # 16
EPS = 1e-6       # LayerNorm eps

assert C == DH, "block-diag head mask layout below assumes C == d_per_head"

# ---- parameter-slab row layout: one (N_ROWS, D) f32 array, one DMA ----
ROW_GAMMA = 0                       # (1, D)  LayerNorm weight
ROW_BETA = 1                        # (1, D)  LayerNorm bias
ROW_BO = 2                          # (1, D)  output-linear bias
ROW_MASKS = 8                       # rows 8..15: lane mask for right-shift s
ROW_WC = 16                         # rows 16..239: KSZ x (GC, GC) tap weights
ROW_BC = ROW_WC + KSZ * GC          # 240: conv bias pre-broadcast to (GC, D)
ROW_WOT = ROW_BC + GC               # 272: wo^T (in, out)
ROW_BD = ROW_WOT + D                # 304: block-diagonal head mask (GC, D)
N_ROWS = ROW_BD + GC                # 336 (multiple of 8)


def _fused_kernel(data_ref, par_ref, out_ref):
    # data_ref: (3*BC, D) = [x | key | value] stacked along sublanes.
    # par_ref : (N_ROWS, D) parameter slab (layout above).
    x = data_ref[0:BC, :]                                   # (16, 32)
    z = data_ref[BC:3 * BC, :]                              # (32, 32) conv input

    gamma = par_ref[ROW_GAMMA:ROW_GAMMA + 1, :]
    beta = par_ref[ROW_BETA:ROW_BETA + 1, :]
    bo = par_ref[ROW_BO:ROW_BO + 1, :]
    bd = par_ref[ROW_BD:ROW_BD + GC, :]                     # (32, 32) head mask

    # ---------------- LayerNorm(d_model) on the query input ----------------
    mu = jnp.mean(x, axis=-1, keepdims=True)
    xc = x - mu
    var = jnp.mean(xc * xc, axis=-1, keepdims=True)
    xn = xc * jax.lax.rsqrt(var + EPS) * gamma + beta       # (16, 32)

    # ------ causal conv on key & value (both batches): 7 accumulated taps ---
    # tap for kernel position t is z shifted right by s = PAD - t with zero
    # fill: one XLU lane roll + a precomputed (1, D) lane mask; the result is
    # accumulated straight into `conv` (no unfolded intermediate).
    conv = par_ref[ROW_BC:ROW_BC + GC, :]                   # init = bias (32, 32)
    for t in range(KSZ):                                    # static unroll
        s = PAD - t
        wt = par_ref[ROW_WC + t * GC:ROW_WC + (t + 1) * GC, :]   # (32, 32)
        if s == 0:
            tap = z
        else:
            mask = par_ref[ROW_MASKS + s:ROW_MASKS + s + 1, :]   # (1, 32)
            tap = pltpu.roll(z, shift=s, axis=1) * mask
        conv = conv + jnp.dot(wt, tap, preferred_element_type=jnp.float32)
    kc = conv[:BC, :]                                       # conv(key)   (16, 32)
    vc = conv[BC:, :]                                       # conv(value) (16, 32)

    # ----------------------- multi-head attention --------------------------
    # Per batch, all heads in one MXU issue: spread K/V into a block-diagonal
    # (H*C, D) operand (sublane tile * precomputed mask). Scores land
    # lane-dense as (C, H*C); PV lands directly in the concatenated-head
    # feature layout (C, D).
    scale = 1.0 / math.sqrt(DH)
    s_blocks = []
    for b in range(B):                                      # static unroll
        xn_b = xn[b * C:(b + 1) * C, :]                     # (8, 32)
        kc_b = kc[b * C:(b + 1) * C, :]                     # (8, 32)
        kspread = jnp.concatenate([kc_b] * H, axis=0) * bd  # (32, 32)
        # contract last-vs-last: Mosaic folds the RHS transpose into the MXU load
        s_b = jax.lax.dot_general(
            xn_b, kspread, dimension_numbers=(((1,), (1,)), ((), ())),
            preferred_element_type=jnp.float32) * scale     # (8, 32)
        s_blocks.append(s_b)
    s_all = jnp.concatenate(s_blocks, axis=0)               # (16, 32), 2 vregs

    # lane-dense softmax: row-wide max is a valid shift for every head segment
    m = jnp.max(s_all, axis=-1, keepdims=True)
    e = jnp.exp(s_all - m)
    seg_sum = jnp.dot(e, bd, preferred_element_type=jnp.float32)  # per-head sums
    p = e * pl.reciprocal(seg_sum, approx=True)             # EUP reciprocal
    # TODO(synk): attention / residual dropout omitted (eval-mode identity).

    outs = []
    for b in range(B):
        vc_b = vc[b * C:(b + 1) * C, :]                     # (8, 32)
        vspread = jnp.concatenate([vc_b] * H, axis=0) * bd  # (32, 32)
        p_b = p[b * C:(b + 1) * C, :]                       # (8, 32)
        outs.append(jnp.dot(p_b, vspread, preferred_element_type=jnp.float32))
    attn = jnp.concatenate(outs, axis=0)                    # (16, 32)

    # ------------------ output projection + residual -----------------------
    woT = par_ref[ROW_WOT:ROW_WOT + D, :]
    out = jnp.dot(attn, woT, preferred_element_type=jnp.float32) + bo + x
    out_ref[...] = out.astype(out_ref.dtype)


def prepare_params(gamma, beta, wk, bk, wv, bv, wo, bo):
    """One-time, host-side parameter packing into a single (N_ROWS, D) slab."""
    gamma = np.asarray(gamma, np.float32); beta = np.asarray(beta, np.float32)
    wk = np.asarray(wk, np.float32); wv = np.asarray(wv, np.float32)
    bk = np.asarray(bk, np.float32); bv = np.asarray(bv, np.float32)
    wo = np.asarray(wo, np.float32); bo = np.asarray(bo, np.float32)

    slab = np.zeros((N_ROWS, D), np.float32)
    slab[ROW_GAMMA] = gamma
    slab[ROW_BETA] = beta
    slab[ROW_BO] = bo

    # lane masks: row s keeps lanes j >= s (zero-fill after a right-shift by s)
    for s in range(8):
        slab[ROW_MASKS + s] = (np.arange(D) >= s).astype(np.float32)

    # per-tap block-diagonal conv weights: Wt[g*C + o, g*C + i] = w_g[o, i, t],
    # groups g = (key,b0), (key,b1), (value,b0), (value,b1)
    for t in range(KSZ):
        wt = np.zeros((GC, GC), np.float32)
        for g in range(G):
            w = wk if g < B else wv
            wt[g * C:(g + 1) * C, g * C:(g + 1) * C] = w[:, :, t]
        slab[ROW_WC + t * GC:ROW_WC + (t + 1) * GC] = wt

    # conv bias, pre-broadcast across lanes (no (32,1) column / in-kernel bcast)
    bc = np.concatenate([bk] * B + [bv] * B)                # (GC,)
    slab[ROW_BC:ROW_BC + GC] = np.repeat(bc[:, None], D, axis=1)

    # output projection, pre-transposed to (in, out)
    slab[ROW_WOT:ROW_WOT + D] = np.ascontiguousarray(wo.T)

    # block-diagonal head mask: bd[h*C + k, h*DH + d] = 1  (C == DH == 8)
    r = np.arange(GC)[:, None] // C
    c = np.arange(D)[None, :] // DH
    slab[ROW_BD:ROW_BD + GC] = (r == c).astype(np.float32)

    return jnp.asarray(slab)


def residual_layernorm_attn(x, key, value, param_slab):
    """x, key, value: (B, C, D) float32 -> (B, C, D) float32."""
    # one data slab: [x | key | value] stacked along sublanes (single DMA)
    data = jnp.concatenate(
        [x.reshape(BC, D), key.reshape(BC, D), value.reshape(BC, D)], axis=0)

    const = lambda i: (0, 0)
    out2 = pl.pallas_call(
        _fused_kernel,
        out_shape=jax.ShapeDtypeStruct((BC, D), jnp.float32),
        grid_spec=pltpu.PrefetchScalarGridSpec(
            num_scalar_prefetch=0,
            grid=(1,),   # whole problem (~60 KB) in a single invocation
            in_specs=[
                pl.BlockSpec((3 * BC, D), const),     # data slab
                pl.BlockSpec((N_ROWS, D), const),     # parameter slab
            ],
            out_specs=pl.BlockSpec((BC, D), const),
        ),
        compiler_params=pltpu.CompilerParams(
            dimension_semantics=("arbitrary",)),
    )(data, param_slab)
    return out2.reshape(B, C, D)


def reference(x, key, value, gamma, beta, wk, bk, wv, bv, wo, bo):
    """Plain-JAX replica of the PyTorch forward (eval mode)."""
    mu = x.mean(-1, keepdims=True)
    var = ((x - mu) ** 2).mean(-1, keepdims=True)
    xn = (x - mu) / jnp.sqrt(var + EPS) * gamma + beta

    def causal_conv(a, w, b):
        ap = jnp.pad(a, ((0, 0), (0, 0), (PAD, 0)))
        out = jax.lax.conv_general_dilated(
            ap, w, window_strides=(1,), padding="VALID",
            dimension_numbers=("NCH", "OIH", "NCH"))
        return out + b[None, :, None]

    kc = causal_conv(key, wk, bk)
    vc = causal_conv(value, wv, bv)

    def split(a):
        return a.reshape(B, C, H, DH).transpose(0, 2, 1, 3)

    qh, kh, vh = split(xn), split(kc), split(vc)
    sc = jnp.einsum("bhqd,bhkd->bhqk", qh, kh) / math.sqrt(DH)
    p = jax.nn.softmax(sc, axis=-1)
    attn = jnp.einsum("bhqk,bhkd->bhqd", p, vh)
    attn = attn.transpose(0, 2, 1, 3).reshape(B, C, D)
    return x + (attn @ wo.T + bo)


if __name__ == "__main__":
    root = jax.random.PRNGKey(0)
    ks = jax.random.split(root, 11)
    x = jax.random.normal(ks[0], (B, C, D), jnp.float32)
    key = jax.random.normal(ks[1], (B, C, D), jnp.float32)
    value = jax.random.normal(ks[2], (B, C, D), jnp.float32)

    # deterministic synthetic parameters (shapes follow the module __init__)
    gamma = 1.0 + 0.1 * jax.random.normal(ks[3], (D,), jnp.float32)   # LayerNorm.weight
    beta = 0.1 * jax.random.normal(ks[4], (D,), jnp.float32)          # LayerNorm.bias
    wk = 0.1 * jax.random.normal(ks[5], (C, C, KSZ), jnp.float32)     # convs[1].weight
    bk = 0.1 * jax.random.normal(ks[6], (C,), jnp.float32)            # convs[1].bias
    wv = 0.1 * jax.random.normal(ks[7], (C, C, KSZ), jnp.float32)     # convs[2].weight
    bv = 0.1 * jax.random.normal(ks[8], (C,), jnp.float32)            # convs[2].bias
    wo = 0.1 * jax.random.normal(ks[9], (D, D), jnp.float32)          # linear.weight (out,in)
    bo = 0.1 * jax.random.normal(ks[10], (D,), jnp.float32)           # linear.bias

    param_slab = prepare_params(gamma, beta, wk, bk, wv, bv, wo, bo)
    out = jax.block_until_ready(residual_layernorm_attn(x, key, value, param_slab))

    ref = jax.block_until_ready(
        reference(x, key, value, gamma, beta, wk, bk, wv, bv, wo, bo))
    np.testing.assert_allclose(np.asarray(out), np.asarray(ref),
                               rtol=5e-3, atol=5e-3)

    print("KERNEL_OK")
</pallas_src>

<mosaic_0001>
module attributes {stable_mosaic.version = 11 : i64} {
  func.func @_fused_kernel(%arg0: i32, %arg1: memref<48x32xf32, #tpu.memory_space<vmem>>, %arg2: memref<336x32xf32, #tpu.memory_space<vmem>>, %arg3: memref<16x32xf32, #tpu.memory_space<vmem>>) attributes {dimension_semantics = [#tpu.dimension_semantics<arbitrary>], iteration_bounds = array<i64: 1>, scalar_prefetch = 0 : i64, scratch_operands = 0 : i64, tpu.core_type = #tpu.core_type<tc>, window_params = [{pipeline_mode = #tpu.pipeline_mode<synchronous>, transform_indices = @transform_0, window_bounds = array<i64: 48, 32>}, {pipeline_mode = #tpu.pipeline_mode<synchronous>, transform_indices = @transform_1, window_bounds = array<i64: 336, 32>}, {pipeline_mode = #tpu.pipeline_mode<synchronous>, transform_indices = @transform_2, window_bounds = array<i64: 16, 32>}]} {
    %c0 = arith.constant 0 : index
    %c0_0 = arith.constant 0 : index
    %0 = vector.load %arg1[%c0, %c0_0] : memref<48x32xf32, #tpu.memory_space<vmem>>, vector<16x32xf32>
    %c16 = arith.constant 16 : index
    %c0_1 = arith.constant 0 : index
    %1 = vector.load %arg1[%c16, %c0_1] : memref<48x32xf32, #tpu.memory_space<vmem>>, vector<32x32xf32>
    %c0_2 = arith.constant 0 : index
    %c0_3 = arith.constant 0 : index
    %2 = vector.load %arg2[%c0_2, %c0_3] : memref<336x32xf32, #tpu.memory_space<vmem>>, vector<1x32xf32>
    %c1 = arith.constant 1 : index
    %c0_4 = arith.constant 0 : index
    %3 = vector.load %arg2[%c1, %c0_4] : memref<336x32xf32, #tpu.memory_space<vmem>>, vector<1x32xf32>
    %c2 = arith.constant 2 : index
    %c0_5 = arith.constant 0 : index
    %4 = vector.load %arg2[%c2, %c0_5] : memref<336x32xf32, #tpu.memory_space<vmem>>, vector<1x32xf32>
    %c304 = arith.constant 304 : index
    %c0_6 = arith.constant 0 : index
    %5 = vector.load %arg2[%c304, %c0_6] : memref<336x32xf32, #tpu.memory_space<vmem>>, vector<32x32xf32>
    %cst = arith.constant dense<0.000000e+00> : vector<16xf32>
    %6 = vector.multi_reduction <add>, %0, %cst [1] : vector<16x32xf32> to vector<16xf32>
    %7 = vector.shape_cast %6 : vector<16xf32> to vector<16x1xf32>
    %cst_7 = arith.constant 3.200000e+01 : f32
    %8 = vector.broadcast %cst_7 : f32 to vector<16x1xf32>
    %9 = arith.divf %7, %8 : vector<16x1xf32>
    %10 = vector.broadcast %9 : vector<16x1xf32> to vector<16x32xf32>
    %11 = arith.subf %0, %10 : vector<16x32xf32>
    %12 = arith.mulf %11, %11 : vector<16x32xf32>
    %cst_8 = arith.constant dense<0.000000e+00> : vector<16xf32>
    %13 = vector.multi_reduction <add>, %12, %cst_8 [1] : vector<16x32xf32> to vector<16xf32>
    %14 = vector.shape_cast %13 : vector<16xf32> to vector<16x1xf32>
    %cst_9 = arith.constant 3.200000e+01 : f32
    %15 = vector.broadcast %cst_9 : f32 to vector<16x1xf32>
    %16 = arith.divf %14, %15 : vector<16x1xf32>
    %cst_10 = arith.constant 9.99999997E-7 : f32
    %17 = vector.broadcast %cst_10 : f32 to vector<16x1xf32>
    %18 = arith.addf %16, %17 : vector<16x1xf32>
    %19 = math.rsqrt %18 : vector<16x1xf32>
    %20 = vector.broadcast %19 : vector<16x1xf32> to vector<16x32xf32>
    %21 = arith.mulf %11, %20 : vector<16x32xf32>
    %22 = vector.broadcast %2 : vector<1x32xf32> to vector<16x32xf32>
    %23 = arith.mulf %21, %22 : vector<16x32xf32>
    %24 = vector.broadcast %3 : vector<1x32xf32> to vector<16x32xf32>
    %25 = arith.addf %23, %24 : vector<16x32xf32>
    %c240 = arith.constant 240 : index
    %c0_11 = arith.constant 0 : index
    %26 = vector.load %arg2[%c240, %c0_11] : memref<336x32xf32, #tpu.memory_space<vmem>>, vector<32x32xf32>
    %c16_12 = arith.constant 16 : index
    %c0_13 = arith.constant 0 : index
    %27 = vector.load %arg2[%c16_12, %c0_13] : memref<336x32xf32, #tpu.memory_space<vmem>>, vector<32x32xf32>
    %c14 = arith.constant 14 : index
    %c0_14 = arith.constant 0 : index
    %28 = vector.load %arg2[%c14, %c0_14] : memref<336x32xf32, #tpu.memory_space<vmem>>, vector<1x32xf32>
    %c6_i32 = arith.constant 6 : i32
    %29 = tpu.dynamic_rotate %1 by %c6_i32 dim 1 : vector<32x32xf32>, i32 -> vector<32x32xf32>
    %30 = vector.broadcast %28 : vector<1x32xf32> to vector<32x32xf32>
    %31 = arith.mulf %29, %30 : vector<32x32xf32>
    %cst_15 = arith.constant dense<0.000000e+00> : vector<32x32xf32>
    %32 = tpu.matmul %27, %31, %cst_15 {dimension_numbers = #tpu.dot_dimension_numbers<[1], [0], [0], [1], [0, 0, 1, 1], [], []>} : vector<32x32xf32>, vector<32x32xf32>, vector<32x32xf32> -> vector<32x32xf32>
    %33 = arith.addf %26, %32 : vector<32x32xf32>
    %c48 = arith.constant 48 : index
    %c0_16 = arith.constant 0 : index
    %34 = vector.load %arg2[%c48, %c0_16] : memref<336x32xf32, #tpu.memory_space<vmem>>, vector<32x32xf32>
    %c13 = arith.constant 13 : index
    %c0_17 = arith.constant 0 : index
    %35 = vector.load %arg2[%c13, %c0_17] : memref<336x32xf32, #tpu.memory_space<vmem>>, vector<1x32xf32>
    %c5_i32 = arith.constant 5 : i32
    %36 = tpu.dynamic_rotate %1 by %c5_i32 dim 1 : vector<32x32xf32>, i32 -> vector<32x32xf32>
    %37 = vector.broadcast %35 : vector<1x32xf32> to vector<32x32xf32>
    %38 = arith.mulf %36, %37 : vector<32x32xf32>
    %cst_18 = arith.constant dense<0.000000e+00> : vector<32x32xf32>
    %39 = tpu.matmul %34, %38, %cst_18 {dimension_numbers = #tpu.dot_dimension_numbers<[1], [0], [0], [1], [0, 0, 1, 1], [], []>} : vector<32x32xf32>, vector<32x32xf32>, vector<32x32xf32> -> vector<32x32xf32>
    %40 = arith.addf %33, %39 : vector<32x32xf32>
    %c80 = arith.constant 80 : index
    %c0_19 = arith.constant 0 : index
    %41 = vector.load %arg2[%c80, %c0_19] : memref<336x32xf32, #tpu.memory_space<vmem>>, vector<32x32xf32>
    %c12 = arith.constant 12 : index
    %c0_20 = arith.constant 0 : index
    %42 = vector.load %arg2[%c12, %c0_20] : memref<336x32xf32, #tpu.memory_space<vmem>>, vector<1x32xf32>
    %c4_i32 = arith.constant 4 : i32
    %43 = tpu.dynamic_rotate %1 by %c4_i32 dim 1 : vector<32x32xf32>, i32 -> vector<32x32xf32>
    %44 = vector.broadcast %42 : vector<1x32xf32> to vector<32x32xf32>
    %45 = arith.mulf %43, %44 : vector<32x32xf32>
    %cst_21 = arith.constant dense<0.000000e+00> : vector<32x32xf32>
    %46 = tpu.matmul %41, %45, %cst_21 {dimension_numbers = #tpu.dot_dimension_numbers<[1], [0], [0], [1], [0, 0, 1, 1], [], []>} : vector<32x32xf32>, vector<32x32xf32>, vector<32x32xf32> -> vector<32x32xf32>
    %47 = arith.addf %40, %46 : vector<32x32xf32>
    %c112 = arith.constant 112 : index
    %c0_22 = arith.constant 0 : index
    %48 = vector.load %arg2[%c112, %c0_22] : memref<336x32xf32, #tpu.memory_space<vmem>>, vector<32x32xf32>
    %c11 = arith.constant 11 : index
    %c0_23 = arith.constant 0 : index
    %49 = vector.load %arg2[%c11, %c0_23] : memref<336x32xf32, #tpu.memory_space<vmem>>, vector<1x32xf32>
    %c3_i32 = arith.constant 3 : i32
    %50 = tpu.dynamic_rotate %1 by %c3_i32 dim 1 : vector<32x32xf32>, i32 -> vector<32x32xf32>
    %51 = vector.broadcast %49 : vector<1x32xf32> to vector<32x32xf32>
    %52 = arith.mulf %50, %51 : vector<32x32xf32>
    %cst_24 = arith.constant dense<0.000000e+00> : vector<32x32xf32>
    %53 = tpu.matmul %48, %52, %cst_24 {dimension_numbers = #tpu.dot_dimension_numbers<[1], [0], [0], [1], [0, 0, 1, 1], [], []>} : vector<32x32xf32>, vector<32x32xf32>, vector<32x32xf32> -> vector<32x32xf32>
    %54 = arith.addf %47, %53 : vector<32x32xf32>
    %c144 = arith.constant 144 : index
    %c0_25 = arith.constant 0 : index
    %55 = vector.load %arg2[%c144, %c0_25] : memref<336x32xf32, #tpu.memory_space<vmem>>, vector<32x32xf32>
    %c10 = arith.constant 10 : index
    %c0_26 = arith.constant 0 : index
    %56 = vector.load %arg2[%c10, %c0_26] : memref<336x32xf32, #tpu.memory_space<vmem>>, vector<1x32xf32>
    %c2_i32 = arith.constant 2 : i32
    %57 = tpu.dynamic_rotate %1 by %c2_i32 dim 1 : vector<32x32xf32>, i32 -> vector<32x32xf32>
    %58 = vector.broadcast %56 : vector<1x32xf32> to vector<32x32xf32>
    %59 = arith.mulf %57, %58 : vector<32x32xf32>
    %cst_27 = arith.constant dense<0.000000e+00> : vector<32x32xf32>
    %60 = tpu.matmul %55, %59, %cst_27 {dimension_numbers = #tpu.dot_dimension_numbers<[1], [0], [0], [1], [0, 0, 1, 1], [], []>} : vector<32x32xf32>, vector<32x32xf32>, vector<32x32xf32> -> vector<32x32xf32>
    %61 = arith.addf %54, %60 : vector<32x32xf32>
    %c176 = arith.constant 176 : index
    %c0_28 = arith.constant 0 : index
    %62 = vector.load %arg2[%c176, %c0_28] : memref<336x32xf32, #tpu.memory_space<vmem>>, vector<32x32xf32>
    %c9 = arith.constant 9 : index
    %c0_29 = arith.constant 0 : index
    %63 = vector.load %arg2[%c9, %c0_29] : memref<336x32xf32, #tpu.memory_space<vmem>>, vector<1x32xf32>
    %c1_i32 = arith.constant 1 : i32
    %64 = tpu.dynamic_rotate %1 by %c1_i32 dim 1 : vector<32x32xf32>, i32 -> vector<32x32xf32>
    %65 = vector.broadcast %63 : vector<1x32xf32> to vector<32x32xf32>
    %66 = arith.mulf %64, %65 : vector<32x32xf32>
    %cst_30 = arith.constant dense<0.000000e+00> : vector<32x32xf32>
    %67 = tpu.matmul %62, %66, %cst_30 {dimension_numbers = #tpu.dot_dimension_numbers<[1], [0], [0], [1], [0, 0, 1, 1], [], []>} : vector<32x32xf32>, vector<32x32xf32>, vector<32x32xf32> -> vector<32x32xf32>
    %68 = arith.addf %61, %67 : vector<32x32xf32>
    %c208 = arith.constant 208 : index
    %c0_31 = arith.constant 0 : index
    %69 = vector.load %arg2[%c208, %c0_31] : memref<336x32xf32, #tpu.memory_space<vmem>>, vector<32x32xf32>
    %cst_32 = arith.constant dense<0.000000e+00> : vector<32x32xf32>
    %70 = tpu.matmul %69, %1, %cst_32 {dimension_numbers = #tpu.dot_dimension_numbers<[1], [0], [0], [1], [0, 0, 1, 1], [], []>} : vector<32x32xf32>, vector<32x32xf32>, vector<32x32xf32> -> vector<32x32xf32>
    %71 = arith.addf %68, %70 : vector<32x32xf32>
    %72 = vector.extract_strided_slice %71 {offsets = [0, 0], sizes = [16, 32], strides = [1, 1]} : vector<32x32xf32> to vector<16x32xf32>
    %73 = vector.extract_strided_slice %71 {offsets = [16, 0], sizes = [16, 32], strides = [1, 1]} : vector<32x32xf32> to vector<16x32xf32>
    %74 = vector.extract_strided_slice %25 {offsets = [0, 0], sizes = [8, 32], strides = [1, 1]} : vector<16x32xf32> to vector<8x32xf32>
    %75 = vector.extract_strided_slice %72 {offsets = [0, 0], sizes = [8, 32], strides = [1, 1]} : vector<16x32xf32> to vector<8x32xf32>
    %76 = tpu.concatenate %75, %75, %75, %75 in 0 : vector<8x32xf32>, vector<8x32xf32>, vector<8x32xf32>, vector<8x32xf32> -> vector<32x32xf32>
    %77 = arith.mulf %76, %5 : vector<32x32xf32>
    %cst_33 = arith.constant dense<0.000000e+00> : vector<8x32xf32>
    %78 = tpu.matmul %74, %77, %cst_33 {dimension_numbers = #tpu.dot_dimension_numbers<[1], [1], [0], [0], [0, 0, 1, 0], [], []>} : vector<8x32xf32>, vector<32x32xf32>, vector<8x32xf32> -> vector<8x32xf32>
    %cst_34 = arith.constant 0.353553385 : f32
    %79 = vector.broadcast %cst_34 : f32 to vector<8x32xf32>
    %80 = arith.mulf %78, %79 : vector<8x32xf32>
    %81 = vector.extract_strided_slice %25 {offsets = [8, 0], sizes = [8, 32], strides = [1, 1]} : vector<16x32xf32> to vector<8x32xf32>
    %82 = vector.extract_strided_slice %72 {offsets = [8, 0], sizes = [8, 32], strides = [1, 1]} : vector<16x32xf32> to vector<8x32xf32>
    %83 = tpu.concatenate %82, %82, %82, %82 in 0 : vector<8x32xf32>, vector<8x32xf32>, vector<8x32xf32>, vector<8x32xf32> -> vector<32x32xf32>
    %84 = arith.mulf %83, %5 : vector<32x32xf32>
    %cst_35 = arith.constant dense<0.000000e+00> : vector<8x32xf32>
    %85 = tpu.matmul %81, %84, %cst_35 {dimension_numbers = #tpu.dot_dimension_numbers<[1], [1], [0], [0], [0, 0, 1, 0], [], []>} : vector<8x32xf32>, vector<32x32xf32>, vector<8x32xf32> -> vector<8x32xf32>
    %cst_36 = arith.constant 0.353553385 : f32
    %86 = vector.broadcast %cst_36 : f32 to vector<8x32xf32>
    %87 = arith.mulf %85, %86 : vector<8x32xf32>
    %88 = tpu.concatenate %80, %87 in 0 : vector<8x32xf32>, vector<8x32xf32> -> vector<16x32xf32>
    %cst_37 = arith.constant dense<0xFF800000> : vector<16xf32>
    %89 = vector.multi_reduction <maximumf>, %88, %cst_37 [1] : vector<16x32xf32> to vector<16xf32>
    %90 = vector.shape_cast %89 : vector<16xf32> to vector<16x1xf32>
    %91 = vector.broadcast %90 : vector<16x1xf32> to vector<16x32xf32>
    %92 = arith.subf %88, %91 : vector<16x32xf32>
    %93 = math.exp %92 : vector<16x32xf32>
    %cst_38 = arith.constant dense<0.000000e+00> : vector<16x32xf32>
    %94 = tpu.matmul %93, %5, %cst_38 {dimension_numbers = #tpu.dot_dimension_numbers<[1], [0], [0], [1], [0, 0, 1, 1], [], []>} : vector<16x32xf32>, vector<32x32xf32>, vector<16x32xf32> -> vector<16x32xf32>
    %95 = tpu.reciprocal %94 {approx = true} : vector<16x32xf32> -> vector<16x32xf32>
    %96 = arith.mulf %93, %95 : vector<16x32xf32>
    %97 = vector.extract_strided_slice %73 {offsets = [0, 0], sizes = [8, 32], strides = [1, 1]} : vector<16x32xf32> to vector<8x32xf32>
    %98 = tpu.concatenate %97, %97, %97, %97 in 0 : vector<8x32xf32>, vector<8x32xf32>, vector<8x32xf32>, vector<8x32xf32> -> vector<32x32xf32>
    %99 = arith.mulf %98, %5 : vector<32x32xf32>
    %100 = vector.extract_strided_slice %96 {offsets = [0, 0], sizes = [8, 32], strides = [1, 1]} : vector<16x32xf32> to vector<8x32xf32>
    %cst_39 = arith.constant dense<0.000000e+00> : vector<8x32xf32>
    %101 = tpu.matmul %100, %99, %cst_39 {dimension_numbers = #tpu.dot_dimension_numbers<[1], [0], [0], [1], [0, 0, 1, 1], [], []>} : vector<8x32xf32>, vector<32x32xf32>, vector<8x32xf32> -> vector<8x32xf32>
    %102 = vector.extract_strided_slice %73 {offsets = [8, 0], sizes = [8, 32], strides = [1, 1]} : vector<16x32xf32> to vector<8x32xf32>
    %103 = tpu.concatenate %102, %102, %102, %102 in 0 : vector<8x32xf32>, vector<8x32xf32>, vector<8x32xf32>, vector<8x32xf32> -> vector<32x32xf32>
    %104 = arith.mulf %103, %5 : vector<32x32xf32>
    %105 = vector.extract_strided_slice %96 {offsets = [8, 0], sizes = [8, 32], strides = [1, 1]} : vector<16x32xf32> to vector<8x32xf32>
    %cst_40 = arith.constant dense<0.000000e+00> : vector<8x32xf32>
    %106 = tpu.matmul %105, %104, %cst_40 {dimension_numbers = #tpu.dot_dimension_numbers<[1], [0], [0], [1], [0, 0, 1, 1], [], []>} : vector<8x32xf32>, vector<32x32xf32>, vector<8x32xf32> -> vector<8x32xf32>
    %107 = tpu.concatenate %101, %106 in 0 : vector<8x32xf32>, vector<8x32xf32> -> vector<16x32xf32>
    %c272 = arith.constant 272 : index
    %c0_41 = arith.constant 0 : index
    %108 = vector.load %arg2[%c272, %c0_41] : memref<336x32xf32, #tpu.memory_space<vmem>>, vector<32x32xf32>
    %cst_42 = arith.constant dense<0.000000e+00> : vector<16x32xf32>
    %109 = tpu.matmul %107, %108, %cst_42 {dimension_numbers = #tpu.dot_dimension_numbers<[1], [0], [0], [1], [0, 0, 1, 1], [], []>} : vector<16x32xf32>, vector<32x32xf32>, vector<16x32xf32> -> vector<16x32xf32>
    %110 = vector.broadcast %4 : vector<1x32xf32> to vector<16x32xf32>
    %111 = arith.addf %109, %110 : vector<16x32xf32>
    %112 = arith.addf %111, %0 : vector<16x32xf32>
    %c0_43 = arith.constant 0 : index
    %c0_44 = arith.constant 0 : index
    %113 = vector.load %arg3[%c0_43, %c0_44] : memref<16x32xf32, #tpu.memory_space<vmem>>, vector<16x32xf32>
    tpu.vector_store %arg3[%c0_43, %c0_44], %112 {strides = array<i32>} : memref<16x32xf32, #tpu.memory_space<vmem>>, vector<16x32xf32>,
    return
  }
  func.func @transform_0(%arg0: i32) -> (i32, i32) {
    %c0_i32 = arith.constant 0 : i32
    %c0_i32_0 = arith.constant 0 : i32
    %c0_i32_1 = arith.constant 0 : i32
    return %c0_i32, %c0_i32_0 : i32, i32
  }
  func.func @transform_1(%arg0: i32) -> (i32, i32) {
    %c0_i32 = arith.constant 0 : i32
    %c0_i32_0 = arith.constant 0 : i32
    %c0_i32_1 = arith.constant 0 : i32
    return %c0_i32, %c0_i32_0 : i32, i32
  }
  func.func @transform_2(%arg0: i32) -> (i32, i32) {
    %c0_i32 = arith.constant 0 : i32
    %c0_i32_0 = arith.constant 0 : i32
    %c0_i32_1 = arith.constant 0 : i32
    return %c0_i32, %c0_i32_0 : i32, i32
  }
}

</mosaic_0001>

<llo_original>
// kernel: tpu_custom_call.1
$region0: #{tpu_custom_call.1}
  #allocation0 [shape = 'u32[]', space=smem, size = 0x4, offset = 0x4, fixed_abs, tag = 'smem constant byte address 0x4 - core index']
  #allocation1 [shape = 'u32[144,128]{1,0:T(1,128)}', space=vmem, size = 0x12000, scoped, tag = 'internal scratch']
  %s0 = inlined_call_operand.vmem [shape: f32[48,32], index: 0, kind: input, shape index: {}]
  %s1 = inlined_call_operand.vmem [shape: f32[336,32], index: 1, kind: input, shape index: {}]
  %s2 = inlined_call_operand.hbm [shape: f32[16,32], index: 2, kind: output, shape index: {}]
  %s3 = sld [smem:[#allocation0]]
  $region18: #{tpu_custom_call.1} parent=0
    _
  %s5 = ssub.s32 1, %s3
  %s6 = scalar_select 0, %s5, %s3
  $region1: #{tpu_custom_call.1} parent=0
    #allocation2 [shape = 'u8[8192]{0}', space=vmem, size = 0x2000, scoped, tag = 'output window, operand 0, single buffered']
    #allocation3 [shape = 's32[1]{0}', space=sflag, size = 0x4, scoped, tag = 'scoped memory for tpu_custom_call.1']
    %7 = vsyncpa [#allocation3], 0
    // Predicated region
    $region2: #{tpu_custom_call.1} parent=1 // pred_check
      _
    $region3: #{tpu_custom_call.1} parent=1 // pred_check_branch
      %9 = sbr.rel (0) target = $region5
    $region4: #{tpu_custom_call.1} parent=1 // pred_region
      _
    $region5: #{tpu_custom_call.1} parent=1 // pred_fallthru
      _
    // Predicated region
    $region6: #{tpu_custom_call.1} parent=1 // pred_check
      _
    $region7: #{tpu_custom_call.1} parent=1 // pred_check_branch
      %11 = sbr.rel (0) target = $region9
    $region8: #{tpu_custom_call.1} parent=1 // pred_region
      _
    $region9: #{tpu_custom_call.1} parent=1 // pred_fallthru
      _
    %v12 = vld [vmem:[%s0] sm:$0xff]
    %v13 = vld [vmem:[%s0 + $0x8] sm:$0xff]
    %v14 = vld [vmem:[%s0 + $0x10] sm:$0xff]
    %v15 = vld [vmem:[%s0 + $0x18] sm:$0xff]
    %v16 = vld [vmem:[%s0 + $0x20] sm:$0xff]
    %v17 = vld [vmem:[%s0 + $0x28] sm:$0xff]
    %v18 = vld [vmem:[%s1] sm:$0x1]
    %v19 = vld [vmem:[%s1 + $0x1] sm:$0x1]
    %v20 = vld [vmem:[%s1 + $0x2] sm:$0x1]
    %v21 = vld [vmem:[%s1 + $0x130] sm:$0xff]
    %v22 = vld [vmem:[%s1 + $0x138] sm:$0xff]
    %v23 = vld [vmem:[%s1 + $0x140] sm:$0xff]
    %v24 = vld [vmem:[%s1 + $0x148] sm:$0xff]
    %vm25 = vcmask 261120
    %v26 = vsel %vm25, %v12, 0.0
    %27 = vadd.xlane.f32.xlu0 %v26
    %v28 = vpop.xlane.xlu0 %27
    %v29 = vsel %vm25, %v13, 0.0
    %30 = vadd.xlane.f32.xlu0 %v29
    %v31 = vpop.xlane.xlu0 %30
    %v32 = vrcp.pop 32.0
    %v33 = vmul.f32 %v28, %v32
    %v34 = vmul.f32 %v31, %v32
    %v35 = vsub.f32 %v12, %v33
    %v36 = vsub.f32 %v13, %v34
    %v37 = vmul.f32 %v35, %v35
    %v38 = vmul.f32 %v36, %v36
    %v39 = vsel %vm25, %v37, 0.0
    %40 = vadd.xlane.f32.xlu0 %v39
    %v41 = vpop.xlane.xlu0 %40
    %v42 = vsel %vm25, %v38, 0.0
    %43 = vadd.xlane.f32.xlu0 %v42
    %v44 = vpop.xlane.xlu0 %43
    %v45 = vmul.f32 %v41, %v32
    %v46 = vmul.f32 %v44, %v32
    %v47 = vadd.f32 %v45, 1e-06
    %v48 = vadd.f32 %v46, 1e-06
    %v49 = vrsqrt.pop %v47
    %v50 = vrsqrt.pop %v48
    %v51 = vmul.f32 %v35, %v49
    %v52 = vmul.f32 %v36, %v50
    %v53 = vlaneseq
    %v54 = vshrl.u32 %v53, 7
    %v55 = vsub.s32 0, %v54
    %v56 = vrot.slane %v18, %v55
    %v57 = vmul.f32 %v51, %v56
    %v58 = vmul.f32 %v52, %v56
    %v59 = vlaneseq
    %v60 = vshrl.u32 %v59, 7
    %v61 = vsub.s32 0, %v60
    %v62 = vrot.slane %v19, %v61
    %v63 = vadd.f32 %v57, %v62
    %v64 = vadd.f32 %v58, %v62
    %v65 = vld [vmem:[%s1 + $0xf0] sm:$0xff]
    %v66 = vld [vmem:[%s1 + $0xf8] sm:$0xff]
    %v67 = vld [vmem:[%s1 + $0x100] sm:$0xff]
    %v68 = vld [vmem:[%s1 + $0x108] sm:$0xff]
    %v69 = vld [vmem:[%s1 + $0x10] sm:$0xff]
    %v70 = vld [vmem:[%s1 + $0x18] sm:$0xff]
    %v71 = vld [vmem:[%s1 + $0x20] sm:$0xff]
    %v72 = vld [vmem:[%s1 + $0x28] sm:$0xff]
    %v73 = vld [vmem:[%s1 + $0xe] sm:$0x1]
    %vm74 = vcmask 1047808
    %75 = vrot.lane.b32.xlu0 %v14, 32
    %v76 = vpop.permute.xlu0 %75
    %v77 = vsel %vm74, %v76, %v14
    %78 = vrot.lane.b32.xlu0 %v15, 32
    %v79 = vpop.permute.xlu0 %78
    %v80 = vsel %vm74, %v79, %v15
    %81 = vrot.lane.b32.xlu0 %v16, 32
    %v82 = vpop.permute.xlu0 %81
    %v83 = vsel %vm74, %v82, %v16
    %84 = vrot.lane.b32.xlu0 %v17, 32
    %v85 = vpop.permute.xlu0 %84
    %v86 = vsel %vm74, %v85, %v17
    %87 = vrot.lane.b32.xlu0 %v77, 32
    %v88 = vpop.permute.xlu0 %87
    %89 = vrot.lane.b32.xlu0 %v80, 32
    %v90 = vpop.permute.xlu0 %89
    %91 = vrot.lane.b32.xlu0 %v83, 32
    %v92 = vpop.permute.xlu0 %91
    %93 = vrot.lane.b32.xlu0 %v86, 32
    %v94 = vpop.permute.xlu0 %93
    %v95 = vsel %vm74, %v88, %v14
    %v96 = vsel %vm74, %v90, %v15
    %v97 = vsel %vm74, %v92, %v16
    %v98 = vsel %vm74, %v94, %v17
    %v99 = vlaneseq
    %v100 = vshrl.u32 %v99, 7
    %v101 = vsub.s32 0, %v100
    %v102 = vrot.slane %v73, %v101
    %104 = vrot.lane.b32.xlu0 %v102, 26
    %v105 = vpop.permute.xlu0 %104
    %v107 = vmul.f32 %v95, %v105
    %v108 = vmul.f32 %v96, %v105
    %v109 = vmul.f32 %v97, %v105
    %v110 = vmul.f32 %v98, %v105
    %115 = vrot.lane.b32.xlu0 %v107, 102
    %v116 = vpop.permute.xlu0 %115
    %117 = vrot.lane.b32.xlu0 %v108, 102
    %v118 = vpop.permute.xlu0 %117
    %119 = vrot.lane.b32.xlu0 %v109, 102
    %v120 = vpop.permute.xlu0 %119
    %121 = vrot.lane.b32.xlu0 %v110, 102
    %v122 = vpop.permute.xlu0 %121
    %v128 = vsel %vm25, %v69, 0
    %v131 = vsel %vm25, %v70, 0
    %v134 = vsel %vm25, %v71, 0
    %v137 = vsel %vm25, %v72, 0
    %139 = vmatprep.subr.mxu0 0.0
    %140 = vmatpush1.msra.mxu0 %v116
    %141 = vmatprep.subr.mxu0 0.0
    %142 = vmatpush1.msra.mxu0 %v118
    %143 = vmatprep.subr.mxu0 0.0
    %144 = vmatpush1.msra.mxu0 %v120
    %145 = vmatprep.subr.mxu0 0.0
    %146 = vmatpush1.msra.mxu0 %v122
    %147 = vmatprep.subr.mxu0 0.0
    %148 = vmatpush1.msra.mxu0 0.0
    %149 = vmatprep.subr.mxu0 0.0
    %150 = vmatpush1.msra.mxu0 0.0
    %151 = vmatprep.subr.mxu0 0.0
    %152 = vmatpush1.msra.mxu0 0.0
    %153 = vmatprep.subr.mxu0 0.0
    %154 = vmatpush1.msra.mxu0 0.0
    %155 = vmatprep.subr.mxu0 0.0
    %156 = vmatpush1.msra.mxu0 0.0
    %157 = vmatprep.subr.mxu0 0.0
    %158 = vmatpush1.msra.mxu0 0.0
    %159 = vmatprep.subr.mxu0 0.0
    %160 = vmatpush1.msra.mxu0 0.0
    %161 = vmatprep.subr.mxu0 0.0
    %162 = vmatpush1.msra.mxu0 0.0
    %163 = vmatprep.subr.mxu0 0.0
    %164 = vmatpush1.msra.mxu0 0.0
    %165 = vmatprep.subr.mxu0 0.0
    %166 = vmatpush1.msra.mxu0 0.0
    %167 = vmatprep.subr.mxu0 0.0
    %168 = vmatpush1.msra.mxu0 0.0
    %169 = vmatprep.subr.mxu0 0.0
    %170 = vmatpush1.msra.mxu0 0.0
    %171 = vmatprep.subr.mxu0 0.0
    %172 = vmatpush1.msra.mxu0 0.0
    %173 = vmatprep.subr.mxu0 0.0
    %174 = vmatpush1.msra.mxu0 0.0
    %175 = vmatprep.subr.mxu0 0.0
    %176 = vmatpush1.msra.mxu0 0.0
    %177 = vmatprep.subr.mxu0 0.0
    %178 = vmatpush1.msra.mxu0 0.0
    %179 = vmatprep.subr.mxu0 0.0
    %180 = vmatpush1.msra.mxu0 0.0
    %181 = vmatprep.subr.mxu0 0.0
    %182 = vmatpush1.msra.mxu0 0.0
    %183 = vmatprep.subr.mxu0 0.0
    %184 = vmatpush1.msra.mxu0 0.0
    %185 = vmatprep.subr.mxu0 0.0
    %186 = vmatpush1.msra.mxu0 0.0
    %187 = vmatprep.subr.mxu0 0.0
    %188 = vmatpush1.msra.mxu0 0.0
    %189 = vmatprep.subr.mxu0 0.0
    %190 = vmatpush1.msra.mxu0 0.0
    %191 = vmatprep.subr.mxu0 0.0
    %192 = vmatpush1.msra.mxu0 0.0
    %193 = vmatprep.subr.mxu0 0.0
    %194 = vmatpush1.msra.mxu0 0.0
    %195 = vmatprep.subr.mxu0 0.0
    %196 = vmatpush1.msra.mxu0 0.0
    %197 = vmatprep.subr.mxu0 0.0
    %198 = vmatpush1.msra.mxu0 0.0
    %199 = vmatprep.subr.mxu0 0.0
    %200 = vmatpush1.msra.mxu0 0.0
    %201 = vmatprep.subr.mxu0 0.0
    %202 = vmatpush1.msra.mxu0 0.0
    %203 = vmatprep.mubr.f32.mxu0 0.0
    %204 = vmatmul.mubr.f32.gmra.mrb[0].mxu0 %v128
    %v205 = vpop.f32.mrb[0].mxu0
    %v206 = vadd.f32 0.0, %v205
    %v207 = vpop.f32.mrb[0].mxu0
    %208 = vmatprep.mubr.f32.mxu0 0.0
    %209 = vmatmul.mubr.f32.gmra.mrb[0].mxu0 %v131
    %v210 = vpop.f32.mrb[0].mxu0
    %v211 = vadd.f32 0.0, %v210
    %v212 = vpop.f32.mrb[0].mxu0
    %213 = vmatprep.mubr.f32.mxu0 0.0
    %214 = vmatmul.mubr.f32.gmra.mrb[0].mxu0 %v134
    %v215 = vpop.f32.mrb[0].mxu0
    %v216 = vadd.f32 0.0, %v215
    %v217 = vpop.f32.mrb[0].mxu0
    %218 = vmatprep.mubr.f32.mxu0 0.0
    %219 = vmatmul.mubr.f32.gmra.mrb[0].mxu0 %v137
    %v220 = vpop.f32.mrb[0].mxu0
    %v221 = vadd.f32 0.0, %v220
    %v222 = vpop.f32.mrb[0].mxu0
    %223 = vdwg.mxu0
    %v224 = vadd.f32 %v65, %v206
    %v225 = vadd.f32 %v66, %v211
    %v226 = vadd.f32 %v67, %v216
    %v227 = vadd.f32 %v68, %v221
    %v228 = vld [vmem:[%s1 + $0x30] sm:$0xff]
    %v229 = vld [vmem:[%s1 + $0x38] sm:$0xff]
    %v230 = vld [vmem:[%s1 + $0x40] sm:$0xff]
    %v231 = vld [vmem:[%s1 + $0x48] sm:$0xff]
    %v232 = vld [vmem:[%s1 + $0xd] sm:$0x1]
    %v233 = vlaneseq
    %v234 = vshrl.u32 %v233, 7
    %v235 = vsub.s32 0, %v234
    %v236 = vrot.slane %v232, %v235
    %238 = vrot.lane.b32.xlu0 %v236, 27
    %v239 = vpop.permute.xlu0 %238
    %v241 = vmul.f32 %v95, %v239
    %v242 = vmul.f32 %v96, %v239
    %v243 = vmul.f32 %v97, %v239
    %v244 = vmul.f32 %v98, %v239
    %249 = vrot.lane.b32.xlu0 %v241, 101
    %v250 = vpop.permute.xlu0 %249
    %251 = vrot.lane.b32.xlu0 %v242, 101
    %v252 = vpop.permute.xlu0 %251
    %253 = vrot.lane.b32.xlu0 %v243, 101
    %v254 = vpop.permute.xlu0 %253
    %255 = vrot.lane.b32.xlu0 %v244, 101
    %v256 = vpop.permute.xlu0 %255
    %v262 = vsel %vm25, %v228, 0
    %v265 = vsel %vm25, %v229, 0
    %v268 = vsel %vm25, %v230, 0
    %v271 = vsel %vm25, %v231, 0
    %273 = vmatprep.subr.mxu0 0.0
    %274 = vmatpush1.msra.mxu0 %v250
    %275 = vmatprep.subr.mxu0 0.0
    %276 = vmatpush1.msra.mxu0 %v252
    %277 = vmatprep.subr.mxu0 0.0
    %278 = vmatpush1.msra.mxu0 %v254
    %279 = vmatprep.subr.mxu0 0.0
    %280 = vmatpush1.msra.mxu0 %v256
    %281 = vmatprep.subr.mxu0 0.0
    %282 = vmatpush1.msra.mxu0 0.0
    %283 = vmatprep.subr.mxu0 0.0
    %284 = vmatpush1.msra.mxu0 0.0
    %285 = vmatprep.subr.mxu0 0.0
    %286 = vmatpush1.msra.mxu0 0.0
    %287 = vmatprep.subr.mxu0 0.0
    %288 = vmatpush1.msra.mxu0 0.0
    %289 = vmatprep.subr.mxu0 0.0
    %290 = vmatpush1.msra.mxu0 0.0
    %291 = vmatprep.subr.mxu0 0.0
    %292 = vmatpush1.msra.mxu0 0.0
    %293 = vmatprep.subr.mxu0 0.0
    %294 = vmatpush1.msra.mxu0 0.0
    %295 = vmatprep.subr.mxu0 0.0
    %296 = vmatpush1.msra.mxu0 0.0
    %297 = vmatprep.subr.mxu0 0.0
    %298 = vmatpush1.msra.mxu0 0.0
    %299 = vmatprep.subr.mxu0 0.0
    %300 = vmatpush1.msra.mxu0 0.0
    %301 = vmatprep.subr.mxu0 0.0
    %302 = vmatpush1.msra.mxu0 0.0
    %303 = vmatprep.subr.mxu0 0.0
    %304 = vmatpush1.msra.mxu0 0.0
    %305 = vmatprep.subr.mxu0 0.0
    %306 = vmatpush1.msra.mxu0 0.0
    %307 = vmatprep.subr.mxu0 0.0
    %308 = vmatpush1.msra.mxu0 0.0
    %309 = vmatprep.subr.mxu0 0.0
    %310 = vmatpush1.msra.mxu0 0.0
    %311 = vmatprep.subr.mxu0 0.0
    %312 = vmatpush1.msra.mxu0 0.0
    %313 = vmatprep.subr.mxu0 0.0
    %314 = vmatpush1.msra.mxu0 0.0
    %315 = vmatprep.subr.mxu0 0.0
    %316 = vmatpush1.msra.mxu0 0.0
    %317 = vmatprep.subr.mxu0 0.0
    %318 = vmatpush1.msra.mxu0 0.0
    %319 = vmatprep.subr.mxu0 0.0
    %320 = vmatpush1.msra.mxu0 0.0
    %321 = vmatprep.subr.mxu0 0.0
    %322 = vmatpush1.msra.mxu0 0.0
    %323 = vmatprep.subr.mxu0 0.0
    %324 = vmatpush1.msra.mxu0 0.0
    %325 = vmatprep.subr.mxu0 0.0
    %326 = vmatpush1.msra.mxu0 0.0
    %327 = vmatprep.subr.mxu0 0.0
    %328 = vmatpush1.msra.mxu0 0.0
    %329 = vmatprep.subr.mxu0 0.0
    %330 = vmatpush1.msra.mxu0 0.0
    %331 = vmatprep.subr.mxu0 0.0
    %332 = vmatpush1.msra.mxu0 0.0
    %333 = vmatprep.subr.mxu0 0.0
    %334 = vmatpush1.msra.mxu0 0.0
    %335 = vmatprep.subr.mxu0 0.0
    %336 = vmatpush1.msra.mxu0 0.0
    %337 = vmatprep.mubr.f32.mxu0 0.0
    %338 = vmatmul.mubr.f32.gmra.mrb[0].mxu0 %v262
    %v339 = vpop.f32.mrb[0].mxu0
    %v340 = vadd.f32 0.0, %v339
    %v341 = vpop.f32.mrb[0].mxu0
    %342 = vmatprep.mubr.f32.mxu0 0.0
    %343 = vmatmul.mubr.f32.gmra.mrb[0].mxu0 %v265
    %v344 = vpop.f32.mrb[0].mxu0
    %v345 = vadd.f32 0.0, %v344
    %v346 = vpop.f32.mrb[0].mxu0
    %347 = vmatprep.mubr.f32.mxu0 0.0
    %348 = vmatmul.mubr.f32.gmra.mrb[0].mxu0 %v268
    %v349 = vpop.f32.mrb[0].mxu0
    %v350 = vadd.f32 0.0, %v349
    %v351 = vpop.f32.mrb[0].mxu0
    %352 = vmatprep.mubr.f32.mxu0 0.0
    %353 = vmatmul.mubr.f32.gmra.mrb[0].mxu0 %v271
    %v354 = vpop.f32.mrb[0].mxu0
    %v355 = vadd.f32 0.0, %v354
    %v356 = vpop.f32.mrb[0].mxu0
    %357 = vdwg.mxu0
    %v358 = vadd.f32 %v224, %v340
    %v359 = vadd.f32 %v225, %v345
    %v360 = vadd.f32 %v226, %v350
    %v361 = vadd.f32 %v227, %v355
    %v362 = vld [vmem:[%s1 + $0x50] sm:$0xff]
    %v363 = vld [vmem:[%s1 + $0x58] sm:$0xff]
    %v364 = vld [vmem:[%s1 + $0x60] sm:$0xff]
    %v365 = vld [vmem:[%s1 + $0x68] sm:$0xff]
    %v366 = vld [vmem:[%s1 + $0xc] sm:$0x1]
    %v367 = vlaneseq
    %v368 = vshrl.u32 %v367, 7
    %v369 = vsub.s32 0, %v368
    %v370 = vrot.slane %v366, %v369
    %372 = vrot.lane.b32.xlu0 %v370, 28
    %v373 = vpop.permute.xlu0 %372
    %v375 = vmul.f32 %v95, %v373
    %v376 = vmul.f32 %v96, %v373
    %v377 = vmul.f32 %v97, %v373
    %v378 = vmul.f32 %v98, %v373
    %383 = vrot.lane.b32.xlu0 %v375, 100
    %v384 = vpop.permute.xlu0 %383
    %385 = vrot.lane.b32.xlu0 %v376, 100
    %v386 = vpop.permute.xlu0 %385
    %387 = vrot.lane.b32.xlu0 %v377, 100
    %v388 = vpop.permute.xlu0 %387
    %389 = vrot.lane.b32.xlu0 %v378, 100
    %v390 = vpop.permute.xlu0 %389
    %v396 = vsel %vm25, %v362, 0
    %v399 = vsel %vm25, %v363, 0
    %v402 = vsel %vm25, %v364, 0
    %v405 = vsel %vm25, %v365, 0
    %407 = vmatprep.subr.mxu0 0.0
    %408 = vmatpush1.msra.mxu0 %v384
    %409 = vmatprep.subr.mxu0 0.0
    %410 = vmatpush1.msra.mxu0 %v386
    %411 = vmatprep.subr.mxu0 0.0
    %412 = vmatpush1.msra.mxu0 %v388
    %413 = vmatprep.subr.mxu0 0.0
    %414 = vmatpush1.msra.mxu0 %v390
    %415 = vmatprep.subr.mxu0 0.0
    %416 = vmatpush1.msra.mxu0 0.0
    %417 = vmatprep.subr.mxu0 0.0
    %418 = vmatpush1.msra.mxu0 0.0
    %419 = vmatprep.subr.mxu0 0.0
    %420 = vmatpush1.msra.mxu0 0.0
    %421 = vmatprep.subr.mxu0 0.0
    %422 = vmatpush1.msra.mxu0 0.0
    %423 = vmatprep.subr.mxu0 0.0
    %424 = vmatpush1.msra.mxu0 0.0
    %425 = vmatprep.subr.mxu0 0.0
    %426 = vmatpush1.msra.mxu0 0.0
    %427 = vmatprep.subr.mxu0 0.0
    %428 = vmatpush1.msra.mxu0 0.0
    %429 = vmatprep.subr.mxu0 0.0
    %430 = vmatpush1.msra.mxu0 0.0
    %431 = vmatprep.subr.mxu0 0.0
    %432 = vmatpush1.msra.mxu0 0.0
    %433 = vmatprep.subr.mxu0 0.0
    %434 = vmatpush1.msra.mxu0 0.0
    %435 = vmatprep.subr.mxu0 0.0
    %436 = vmatpush1.msra.mxu0 0.0
    %437 = vmatprep.subr.mxu0 0.0
    %438 = vmatpush1.msra.mxu0 0.0
    %439 = vmatprep.subr.mxu0 0.0
    %440 = vmatpush1.msra.mxu0 0.0
    %441 = vmatprep.subr.mxu0 0.0
    %442 = vmatpush1.msra.mxu0 0.0
    %443 = vmatprep.subr.mxu0 0.0
    %444 = vmatpush1.msra.mxu0 0.0
    %445 = vmatprep.subr.mxu0 0.0
    %446 = vmatpush1.msra.mxu0 0.0
    %447 = vmatprep.subr.mxu0 0.0
    %448 = vmatpush1.msra.mxu0 0.0
    %449 = vmatprep.subr.mxu0 0.0
    %450 = vmatpush1.msra.mxu0 0.0
    %451 = vmatprep.subr.mxu0 0.0
    %452 = vmatpush1.msra.mxu0 0.0
    %453 = vmatprep.subr.mxu0 0.0
    %454 = vmatpush1.msra.mxu0 0.0
    %455 = vmatprep.subr.mxu0 0.0
    %456 = vmatpush1.msra.mxu0 0.0
    %457 = vmatprep.subr.mxu0 0.0
    %458 = vmatpush1.msra.mxu0 0.0
    %459 = vmatprep.subr.mxu0 0.0
    %460 = vmatpush1.msra.mxu0 0.0
    %461 = vmatprep.subr.mxu0 0.0
    %462 = vmatpush1.msra.mxu0 0.0
    %463 = vmatprep.subr.mxu0 0.0
    %464 = vmatpush1.msra.mxu0 0.0
    %465 = vmatprep.subr.mxu0 0.0
    %466 = vmatpush1.msra.mxu0 0.0
    %467 = vmatprep.subr.mxu0 0.0
    %468 = vmatpush1.msra.mxu0 0.0
    %469 = vmatprep.subr.mxu0 0.0
    %470 = vmatpush1.msra.mxu0 0.0
    %471 = vmatprep.mubr.f32.mxu0 0.0
    %472 = vmatmul.mubr.f32.gmra.mrb[0].mxu0 %v396
    %v473 = vpop.f32.mrb[0].mxu0
    %v474 = vadd.f32 0.0, %v473
    %v475 = vpop.f32.mrb[0].mxu0
    %476 = vmatprep.mubr.f32.mxu0 0.0
    %477 = vmatmul.mubr.f32.gmra.mrb[0].mxu0 %v399
    %v478 = vpop.f32.mrb[0].mxu0
    %v479 = vadd.f32 0.0, %v478
    %v480 = vpop.f32.mrb[0].mxu0
    %481 = vmatprep.mubr.f32.mxu0 0.0
    %482 = vmatmul.mubr.f32.gmra.mrb[0].mxu0 %v402
    %v483 = vpop.f32.mrb[0].mxu0
    %v484 = vadd.f32 0.0, %v483
    %v485 = vpop.f32.mrb[0].mxu0
    %486 = vmatprep.mubr.f32.mxu0 0.0
    %487 = vmatmul.mubr.f32.gmra.mrb[0].mxu0 %v405
    %v488 = vpop.f32.mrb[0].mxu0
    %v489 = vadd.f32 0.0, %v488
    %v490 = vpop.f32.mrb[0].mxu0
    %491 = vdwg.mxu0
    %v492 = vadd.f32 %v358, %v474
    %v493 = vadd.f32 %v359, %v479
    %v494 = vadd.f32 %v360, %v484
    %v495 = vadd.f32 %v361, %v489
    %v496 = vld [vmem:[%s1 + $0x70] sm:$0xff]
    %v497 = vld [vmem:[%s1 + $0x78] sm:$0xff]
    %v498 = vld [vmem:[%s1 + $0x80] sm:$0xff]
    %v499 = vld [vmem:[%s1 + $0x88] sm:$0xff]
    %v500 = vld [vmem:[%s1 + $0xb] sm:$0x1]
    %v501 = vlaneseq
    %v502 = vshrl.u32 %v501, 7
    %v503 = vsub.s32 0, %v502
    %v504 = vrot.slane %v500, %v503
    %506 = vrot.lane.b32.xlu0 %v504, 29
    %v507 = vpop.permute.xlu0 %506
    %v509 = vmul.f32 %v95, %v507
    %v510 = vmul.f32 %v96, %v507
    %v511 = vmul.f32 %v97, %v507
    %v512 = vmul.f32 %v98, %v507
    %517 = vrot.lane.b32.xlu0 %v509, 99
    %v518 = vpop.permute.xlu0 %517
    %519 = vrot.lane.b32.xlu0 %v510, 99
    %v520 = vpop.permute.xlu0 %519
    %521 = vrot.lane.b32.xlu0 %v511, 99
    %v522 = vpop.permute.xlu0 %521
    %523 = vrot.lane.b32.xlu0 %v512, 99
    %v524 = vpop.permute.xlu0 %523
    %v530 = vsel %vm25, %v496, 0
    %v533 = vsel %vm25, %v497, 0
    %v536 = vsel %vm25, %v498, 0
    %v539 = vsel %vm25, %v499, 0
    %541 = vmatprep.subr.mxu0 0.0
    %542 = vmatpush1.msra.mxu0 %v518
    %543 = vmatprep.subr.mxu0 0.0
    %544 = vmatpush1.msra.mxu0 %v520
    %545 = vmatprep.subr.mxu0 0.0
    %546 = vmatpush1.msra.mxu0 %v522
    %547 = vmatprep.subr.mxu0 0.0
    %548 = vmatpush1.msra.mxu0 %v524
    %549 = vmatprep.subr.mxu0 0.0
    %550 = vmatpush1.msra.mxu0 0.0
    %551 = vmatprep.subr.mxu0 0.0
    %552 = vmatpush1.msra.mxu0 0.0
    %553 = vmatprep.subr.mxu0 0.0
    %554 = vmatpush1.msra.mxu0 0.0
    %555 = vmatprep.subr.mxu0 0.0
    %556 = vmatpush1.msra.mxu0 0.0
    %557 = vmatprep.subr.mxu0 0.0
    %558 = vmatpush1.msra.mxu0 0.0
    %559 = vmatprep.subr.mxu0 0.0
    %560 = vmatpush1.msra.mxu0 0.0
    %561 = vmatprep.subr.mxu0 0.0
    %562 = vmatpush1.msra.mxu0 0.0
    %563 = vmatprep.subr.mxu0 0.0
    %564 = vmatpush1.msra.mxu0 0.0
    %565 = vmatprep.subr.mxu0 0.0
    %566 = vmatpush1.msra.mxu0 0.0
    %567 = vmatprep.subr.mxu0 0.0
    %568 = vmatpush1.msra.mxu0 0.0
    %569 = vmatprep.subr.mxu0 0.0
    %570 = vmatpush1.msra.mxu0 0.0
    %571 = vmatprep.subr.mxu0 0.0
    %572 = vmatpush1.msra.mxu0 0.0
    %573 = vmatprep.subr.mxu0 0.0
    %574 = vmatpush1.msra.mxu0 0.0
    %575 = vmatprep.subr.mxu0 0.0
    %576 = vmatpush1.msra.mxu0 0.0
    %577 = vmatprep.subr.mxu0 0.0
    %578 = vmatpush1.msra.mxu0 0.0
    %579 = vmatprep.subr.mxu0 0.0
    %580 = vmatpush1.msra.mxu0 0.0
    %581 = vmatprep.subr.mxu0 0.0
    %582 = vmatpush1.msra.mxu0 0.0
    %583 = vmatprep.subr.mxu0 0.0
    %584 = vmatpush1.msra.mxu0 0.0
    %585 = vmatprep.subr.mxu0 0.0
    %586 = vmatpush1.msra.mxu0 0.0
    %587 = vmatprep.subr.mxu0 0.0
    %588 = vmatpush1.msra.mxu0 0.0
    %589 = vmatprep.subr.mxu0 0.0
    %590 = vmatpush1.msra.mxu0 0.0
    %591 = vmatprep.subr.mxu0 0.0
    %592 = vmatpush1.msra.mxu0 0.0
    %593 = vmatprep.subr.mxu0 0.0
    %594 = vmatpush1.msra.mxu0 0.0
    %595 = vmatprep.subr.mxu0 0.0
    %596 = vmatpush1.msra.mxu0 0.0
    %597 = vmatprep.subr.mxu0 0.0
    %598 = vmatpush1.msra.mxu0 0.0
    %599 = vmatprep.subr.mxu0 0.0
    %600 = vmatpush1.msra.mxu0 0.0
    %601 = vmatprep.subr.mxu0 0.0
    %602 = vmatpush1.msra.mxu0 0.0
    %603 = vmatprep.subr.mxu0 0.0
    %604 = vmatpush1.msra.mxu0 0.0
    %605 = vmatprep.mubr.f32.mxu0 0.0
    %606 = vmatmul.mubr.f32.gmra.mrb[0].mxu0 %v530
    %v607 = vpop.f32.mrb[0].mxu0
    %v608 = vadd.f32 0.0, %v607
    %v609 = vpop.f32.mrb[0].mxu0
    %610 = vmatprep.mubr.f32.mxu0 0.0
    %611 = vmatmul.mubr.f32.gmra.mrb[0].mxu0 %v533
    %v612 = vpop.f32.mrb[0].mxu0
    %v613 = vadd.f32 0.0, %v612
    %v614 = vpop.f32.mrb[0].mxu0
    %615 = vmatprep.mubr.f32.mxu0 0.0
    %616 = vmatmul.mubr.f32.gmra.mrb[0].mxu0 %v536
    %v617 = vpop.f32.mrb[0].mxu0
    %v618 = vadd.f32 0.0, %v617
    %v619 = vpop.f32.mrb[0].mxu0
    %620 = vmatprep.mubr.f32.mxu0 0.0
    %621 = vmatmul.mubr.f32.gmra.mrb[0].mxu0 %v539
    %v622 = vpop.f32.mrb[0].mxu0
    %v623 = vadd.f32 0.0, %v622
    %v624 = vpop.f32.mrb[0].mxu0
    %625 = vdwg.mxu0
    %v626 = vadd.f32 %v492, %v608
    %v627 = vadd.f32 %v493, %v613
    %v628 = vadd.f32 %v494, %v618
    %v629 = vadd.f32 %v495, %v623
    %v630 = vld [vmem:[%s1 + $0x90] sm:$0xff]
    %v631 = vld [vmem:[%s1 + $0x98] sm:$0xff]
    %v632 = vld [vmem:[%s1 + $0xa0] sm:$0xff]
    %v633 = vld [vmem:[%s1 + $0xa8] sm:$0xff]
    %v634 = vld [vmem:[%s1 + $0xa] sm:$0x1]
    %v635 = vlaneseq
    %v636 = vshrl.u32 %v635, 7
    %v637 = vsub.s32 0, %v636
    %v638 = vrot.slane %v634, %v637
    %640 = vrot.lane.b32.xlu0 %v638, 30
    %v641 = vpop.permute.xlu0 %640
    %v643 = vmul.f32 %v95, %v641
    %v644 = vmul.f32 %v96, %v641
    %v645 = vmul.f32 %v97, %v641
    %v646 = vmul.f32 %v98, %v641
    %651 = vrot.lane.b32.xlu0 %v643, 98
    %v652 = vpop.permute.xlu0 %651
    %653 = vrot.lane.b32.xlu0 %v644, 98
    %v654 = vpop.permute.xlu0 %653
    %655 = vrot.lane.b32.xlu0 %v645, 98
    %v656 = vpop.permute.xlu0 %655
    %657 = vrot.lane.b32.xlu0 %v646, 98
    %v658 = vpop.permute.xlu0 %657
    %v664 = vsel %vm25, %v630, 0
    %v667 = vsel %vm25, %v631, 0
    %v670 = vsel %vm25, %v632, 0
    %v673 = vsel %vm25, %v633, 0
    %675 = vmatprep.subr.mxu0 0.0
    %676 = vmatpush1.msra.mxu0 %v652
    %677 = vmatprep.subr.mxu0 0.0
    %678 = vmatpush1.msra.mxu0 %v654
    %679 = vmatprep.subr.mxu0 0.0
    %680 = vmatpush1.msra.mxu0 %v656
    %681 = vmatprep.subr.mxu0 0.0
    %682 = vmatpush1.msra.mxu0 %v658
    %683 = vmatprep.subr.mxu0 0.0
    %684 = vmatpush1.msra.mxu0 0.0
    %685 = vmatprep.subr.mxu0 0.0
    %686 = vmatpush1.msra.mxu0 0.0
    %687 = vmatprep.subr.mxu0 0.0
    %688 = vmatpush1.msra.mxu0 0.0
    %689 = vmatprep.subr.mxu0 0.0
    %690 = vmatpush1.msra.mxu0 0.0
    %691 = vmatprep.subr.mxu0 0.0
    %692 = vmatpush1.msra.mxu0 0.0
    %693 = vmatprep.subr.mxu0 0.0
    %694 = vmatpush1.msra.mxu0 0.0
    %695 = vmatprep.subr.mxu0 0.0
    %696 = vmatpush1.msra.mxu0 0.0
    %697 = vmatprep.subr.mxu0 0.0
    %698 = vmatpush1.msra.mxu0 0.0
    %699 = vmatprep.subr.mxu0 0.0
    %700 = vmatpush1.msra.mxu0 0.0
    %701 = vmatprep.subr.mxu0 0.0
    %702 = vmatpush1.msra.mxu0 0.0
    %703 = vmatprep.subr.mxu0 0.0
    %704 = vmatpush1.msra.mxu0 0.0
    %705 = vmatprep.subr.mxu0 0.0
    %706 = vmatpush1.msra.mxu0 0.0
    %707 = vmatprep.subr.mxu0 0.0
    %708 = vmatpush1.msra.mxu0 0.0
    %709 = vmatprep.subr.mxu0 0.0
    %710 = vmatpush1.msra.mxu0 0.0
    %711 = vmatprep.subr.mxu0 0.0
    %712 = vmatpush1.msra.mxu0 0.0
    %713 = vmatprep.subr.mxu0 0.0
    %714 = vmatpush1.msra.mxu0 0.0
    %715 = vmatprep.subr.mxu0 0.0
    %716 = vmatpush1.msra.mxu0 0.0
    %717 = vmatprep.subr.mxu0 0.0
    %718 = vmatpush1.msra.mxu0 0.0
    %719 = vmatprep.subr.mxu0 0.0
    %720 = vmatpush1.msra.mxu0 0.0
    %721 = vmatprep.subr.mxu0 0.0
    %722 = vmatpush1.msra.mxu0 0.0
    %723 = vmatprep.subr.mxu0 0.0
    %724 = vmatpush1.msra.mxu0 0.0
    %725 = vmatprep.subr.mxu0 0.0
    %726 = vmatpush1.msra.mxu0 0.0
    %727 = vmatprep.subr.mxu0 0.0
    %728 = vmatpush1.msra.mxu0 0.0
    %729 = vmatprep.subr.mxu0 0.0
    %730 = vmatpush1.msra.mxu0 0.0
    %731 = vmatprep.subr.mxu0 0.0
    %732 = vmatpush1.msra.mxu0 0.0
    %733 = vmatprep.subr.mxu0 0.0
    %734 = vmatpush1.msra.mxu0 0.0
    %735 = vmatprep.subr.mxu0 0.0
    %736 = vmatpush1.msra.mxu0 0.0
    %737 = vmatprep.subr.mxu0 0.0
    %738 = vmatpush1.msra.mxu0 0.0
    %739 = vmatprep.mubr.f32.mxu0 0.0
    %740 = vmatmul.mubr.f32.gmra.mrb[0].mxu0 %v664
    %v741 = vpop.f32.mrb[0].mxu0
    %v742 = vadd.f32 0.0, %v741
    %v743 = vpop.f32.mrb[0].mxu0
    %744 = vmatprep.mubr.f32.mxu0 0.0
    %745 = vmatmul.mubr.f32.gmra.mrb[0].mxu0 %v667
    %v746 = vpop.f32.mrb[0].mxu0
    %v747 = vadd.f32 0.0, %v746
    %v748 = vpop.f32.mrb[0].mxu0
    %749 = vmatprep.mubr.f32.mxu0 0.0
    %750 = vmatmul.mubr.f32.gmra.mrb[0].mxu0 %v670
    %v751 = vpop.f32.mrb[0].mxu0
    %v752 = vadd.f32 0.0, %v751
    %v753 = vpop.f32.mrb[0].mxu0
    %754 = vmatprep.mubr.f32.mxu0 0.0
    %755 = vmatmul.mubr.f32.gmra.mrb[0].mxu0 %v673
    %v756 = vpop.f32.mrb[0].mxu0
    %v757 = vadd.f32 0.0, %v756
    %v758 = vpop.f32.mrb[0].mxu0
    %759 = vdwg.mxu0
    %v760 = vadd.f32 %v626, %v742
    %v761 = vadd.f32 %v627, %v747
    %v762 = vadd.f32 %v628, %v752
    %v763 = vadd.f32 %v629, %v757
    %v764 = vld [vmem:[%s1 + $0xb0] sm:$0xff]
    %v765 = vld [vmem:[%s1 + $0xb8] sm:$0xff]
    %v766 = vld [vmem:[%s1 + $0xc0] sm:$0xff]
    %v767 = vld [vmem:[%s1 + $0xc8] sm:$0xff]
    %v768 = vld [vmem:[%s1 + $0x9] sm:$0x1]
    %v769 = vlaneseq
    %v770 = vshrl.u32 %v769, 7
    %v771 = vsub.s32 0, %v770
    %v772 = vrot.slane %v768, %v771
    %774 = vrot.lane.b32.xlu0 %v772, 31
    %v775 = vpop.permute.xlu0 %774
    %v777 = vmul.f32 %v95, %v775
    %v778 = vmul.f32 %v96, %v775
    %v779 = vmul.f32 %v97, %v775
    %v780 = vmul.f32 %v98, %v775
    %785 = vrot.lane.b32.xlu0 %v777, 97
    %v786 = vpop.permute.xlu0 %785
    %787 = vrot.lane.b32.xlu0 %v778, 97
    %v788 = vpop.permute.xlu0 %787
    %789 = vrot.lane.b32.xlu0 %v779, 97
    %v790 = vpop.permute.xlu0 %789
    %791 = vrot.lane.b32.xlu0 %v780, 97
    %v792 = vpop.permute.xlu0 %791
    %v798 = vsel %vm25, %v764, 0
    %v801 = vsel %vm25, %v765, 0
    %v804 = vsel %vm25, %v766, 0
    %v807 = vsel %vm25, %v767, 0
    %809 = vmatprep.subr.mxu0 0.0
    %810 = vmatpush1.msra.mxu0 %v786
    %811 = vmatprep.subr.mxu0 0.0
    %812 = vmatpush1.msra.mxu0 %v788
    %813 = vmatprep.subr.mxu0 0.0
    %814 = vmatpush1.msra.mxu0 %v790
    %815 = vmatprep.subr.mxu0 0.0
    %816 = vmatpush1.msra.mxu0 %v792
    %817 = vmatprep.subr.mxu0 0.0
    %818 = vmatpush1.msra.mxu0 0.0
    %819 = vmatprep.subr.mxu0 0.0
    %820 = vmatpush1.msra.mxu0 0.0
    %821 = vmatprep.subr.mxu0 0.0
    %822 = vmatpush1.msra.mxu0 0.0
    %823 = vmatprep.subr.mxu0 0.0
    %824 = vmatpush1.msra.mxu0 0.0
    %825 = vmatprep.subr.mxu0 0.0
    %826 = vmatpush1.msra.mxu0 0.0
    %827 = vmatprep.subr.mxu0 0.0
    %828 = vmatpush1.msra.mxu0 0.0
    %829 = vmatprep.subr.mxu0 0.0
    %830 = vmatpush1.msra.mxu0 0.0
    %831 = vmatprep.subr.mxu0 0.0
    %832 = vmatpush1.msra.mxu0 0.0
    %833 = vmatprep.subr.mxu0 0.0
    %834 = vmatpush1.msra.mxu0 0.0
    %835 = vmatprep.subr.mxu0 0.0
    %836 = vmatpush1.msra.mxu0 0.0
    %837 = vmatprep.subr.mxu0 0.0
    %838 = vmatpush1.msra.mxu0 0.0
    %839 = vmatprep.subr.mxu0 0.0
    %840 = vmatpush1.msra.mxu0 0.0
    %841 = vmatprep.subr.mxu0 0.0
    %842 = vmatpush1.msra.mxu0 0.0
    %843 = vmatprep.subr.mxu0 0.0
    %844 = vmatpush1.msra.mxu0 0.0
    %845 = vmatprep.subr.mxu0 0.0
    %846 = vmatpush1.msra.mxu0 0.0
    %847 = vmatprep.subr.mxu0 0.0
    %848 = vmatpush1.msra.mxu0 0.0
    %849 = vmatprep.subr.mxu0 0.0
    %850 = vmatpush1.msra.mxu0 0.0
    %851 = vmatprep.subr.mxu0 0.0
    %852 = vmatpush1.msra.mxu0 0.0
    %853 = vmatprep.subr.mxu0 0.0
    %854 = vmatpush1.msra.mxu0 0.0
    %855 = vmatprep.subr.mxu0 0.0
    %856 = vmatpush1.msra.mxu0 0.0
    %857 = vmatprep.subr.mxu0 0.0
    %858 = vmatpush1.msra.mxu0 0.0
    %859 = vmatprep.subr.mxu0 0.0
    %860 = vmatpush1.msra.mxu0 0.0
    %861 = vmatprep.subr.mxu0 0.0
    %862 = vmatpush1.msra.mxu0 0.0
    %863 = vmatprep.subr.mxu0 0.0
    %864 = vmatpush1.msra.mxu0 0.0
    %865 = vmatprep.subr.mxu0 0.0
    %866 = vmatpush1.msra.mxu0 0.0
    %867 = vmatprep.subr.mxu0 0.0
    %868 = vmatpush1.msra.mxu0 0.0
    %869 = vmatprep.subr.mxu0 0.0
    %870 = vmatpush1.msra.mxu0 0.0
    %871 = vmatprep.subr.mxu0 0.0
    %872 = vmatpush1.msra.mxu0 0.0
    %873 = vmatprep.mubr.f32.mxu0 0.0
    %874 = vmatmul.mubr.f32.gmra.mrb[0].mxu0 %v798
    %v875 = vpop.f32.mrb[0].mxu0
    %v876 = vadd.f32 0.0, %v875
    %v877 = vpop.f32.mrb[0].mxu0
    %878 = vmatprep.mubr.f32.mxu0 0.0
    %879 = vmatmul.mubr.f32.gmra.mrb[0].mxu0 %v801
    %v880 = vpop.f32.mrb[0].mxu0
    %v881 = vadd.f32 0.0, %v880
    %v882 = vpop.f32.mrb[0].mxu0
    %883 = vmatprep.mubr.f32.mxu0 0.0
    %884 = vmatmul.mubr.f32.gmra.mrb[0].mxu0 %v804
    %v885 = vpop.f32.mrb[0].mxu0
    %v886 = vadd.f32 0.0, %v885
    %v887 = vpop.f32.mrb[0].mxu0
    %888 = vmatprep.mubr.f32.mxu0 0.0
    %889 = vmatmul.mubr.f32.gmra.mrb[0].mxu0 %v807
    %v890 = vpop.f32.mrb[0].mxu0
    %v891 = vadd.f32 0.0, %v890
    %v892 = vpop.f32.mrb[0].mxu0
    %893 = vdwg.mxu0
    %v894 = vadd.f32 %v760, %v876
    %v895 = vadd.f32 %v761, %v881
    %v896 = vadd.f32 %v762, %v886
    %v897 = vadd.f32 %v763, %v891
    %v898 = vld [vmem:[%s1 + $0xd0] sm:$0xff]
    %v899 = vld [vmem:[%s1 + $0xd8] sm:$0xff]
    %v900 = vld [vmem:[%s1 + $0xe0] sm:$0xff]
    %v901 = vld [vmem:[%s1 + $0xe8] sm:$0xff]
    %v903 = vsel %vm25, %v898, 0
    %v906 = vsel %vm25, %v899, 0
    %v909 = vsel %vm25, %v900, 0
    %v912 = vsel %vm25, %v901, 0
    %914 = vmatprep.subr.mxu0 0.0
    %915 = vmatpush1.msra.mxu0 %v14
    %916 = vmatprep.subr.mxu0 0.0
    %917 = vmatpush1.msra.mxu0 %v15
    %918 = vmatprep.subr.mxu0 0.0
    %919 = vmatpush1.msra.mxu0 %v16
    %920 = vmatprep.subr.mxu0 0.0
    %921 = vmatpush1.msra.mxu0 %v17
    %922 = vmatprep.subr.mxu0 0.0
    %923 = vmatpush1.msra.mxu0 0.0
    %924 = vmatprep.subr.mxu0 0.0
    %925 = vmatpush1.msra.mxu0 0.0
    %926 = vmatprep.subr.mxu0 0.0
    %927 = vmatpush1.msra.mxu0 0.0
    %928 = vmatprep.subr.mxu0 0.0
    %929 = vmatpush1.msra.mxu0 0.0
    %930 = vmatprep.subr.mxu0 0.0
    %931 = vmatpush1.msra.mxu0 0.0
    %932 = vmatprep.subr.mxu0 0.0
    %933 = vmatpush1.msra.mxu0 0.0
    %934 = vmatprep.subr.mxu0 0.0
    %935 = vmatpush1.msra.mxu0 0.0
    %936 = vmatprep.subr.mxu0 0.0
    %937 = vmatpush1.msra.mxu0 0.0
    %938 = vmatprep.subr.mxu0 0.0
    %939 = vmatpush1.msra.mxu0 0.0
    %940 = vmatprep.subr.mxu0 0.0
    %941 = vmatpush1.msra.mxu0 0.0
    %942 = vmatprep.subr.mxu0 0.0
    %943 = vmatpush1.msra.mxu0 0.0
    %944 = vmatprep.subr.mxu0 0.0
    %945 = vmatpush1.msra.mxu0 0.0
    %946 = vmatprep.subr.mxu0 0.0
    %947 = vmatpush1.msra.mxu0 0.0
    %948 = vmatprep.subr.mxu0 0.0
    %949 = vmatpush1.msra.mxu0 0.0
    %950 = vmatprep.subr.mxu0 0.0
    %951 = vmatpush1.msra.mxu0 0.0
    %952 = vmatprep.subr.mxu0 0.0
    %953 = vmatpush1.msra.mxu0 0.0
    %954 = vmatprep.subr.mxu0 0.0
    %955 = vmatpush1.msra.mxu0 0.0
    %956 = vmatprep.subr.mxu0 0.0
    %957 = vmatpush1.msra.mxu0 0.0
    %958 = vmatprep.subr.mxu0 0.0
    %959 = vmatpush1.msra.mxu0 0.0
    %960 = vmatprep.subr.mxu0 0.0
    %961 = vmatpush1.msra.mxu0 0.0
    %962 = vmatprep.subr.mxu0 0.0
    %963 = vmatpush1.msra.mxu0 0.0
    %964 = vmatprep.subr.mxu0 0.0
    %965 = vmatpush1.msra.mxu0 0.0
    %966 = vmatprep.subr.mxu0 0.0
    %967 = vmatpush1.msra.mxu0 0.0
    %968 = vmatprep.subr.mxu0 0.0
    %969 = vmatpush1.msra.mxu0 0.0
    %970 = vmatprep.subr.mxu0 0.0
    %971 = vmatpush1.msra.mxu0 0.0
    %972 = vmatprep.subr.mxu0 0.0
    %973 = vmatpush1.msra.mxu0 0.0
    %974 = vmatprep.subr.mxu0 0.0
    %975 = vmatpush1.msra.mxu0 0.0
    %976 = vmatprep.subr.mxu0 0.0
    %977 = vmatpush1.msra.mxu0 0.0
    %978 = vmatprep.mubr.f32.mxu0 0.0
    %979 = vmatmul.mubr.f32.gmra.mrb[0].mxu0 %v903
    %v980 = vpop.f32.mrb[0].mxu0
    %v981 = vadd.f32 0.0, %v980
    %v982 = vpop.f32.mrb[0].mxu0
    %983 = vmatprep.mubr.f32.mxu0 0.0
    %984 = vmatmul.mubr.f32.gmra.mrb[0].mxu0 %v906
    %v985 = vpop.f32.mrb[0].mxu0
    %v986 = vadd.f32 0.0, %v985
    %v987 = vpop.f32.mrb[0].mxu0
    %988 = vmatprep.mubr.f32.mxu0 0.0
    %989 = vmatmul.mubr.f32.gmra.mrb[0].mxu0 %v909
    %v990 = vpop.f32.mrb[0].mxu0
    %v991 = vadd.f32 0.0, %v990
    %v992 = vpop.f32.mrb[0].mxu0
    %993 = vmatprep.mubr.f32.mxu0 0.0
    %994 = vmatmul.mubr.f32.gmra.mrb[0].mxu0 %v912
    %v995 = vpop.f32.mrb[0].mxu0
    %v996 = vadd.f32 0.0, %v995
    %v997 = vpop.f32.mrb[0].mxu0
    %998 = vdwg.mxu0
    %v999 = vadd.f32 %v894, %v981
    %v1000 = vadd.f32 %v895, %v986
    %v1001 = vadd.f32 %v896, %v991
    %v1002 = vadd.f32 %v897, %v996
    %v1003 = vmul.f32 %v999, %v21
    %v1004 = vmul.f32 %v999, %v22
    %v1005 = vmul.f32 %v999, %v23
    %v1006 = vmul.f32 %v999, %v24
    %v1008 = vsel %vm25, %v63, 0
    %v1011 = vsel %vm25, %v1003, 0
    %v1014 = vsel %vm25, %v1004, 0
    %v1017 = vsel %vm25, %v1005, 0
    %v1020 = vsel %vm25, %v1006, 0
    %1022 = vmatprep.subr.mxu0 0.0
    %1023 = vmatpush1.xpose.msra.mxu0 %v1011
    %1024 = vmatprep.subr.mxu0 0.0
    %1025 = vmatpush1.xpose.msra.mxu0 %v1014
    %1026 = vmatprep.subr.mxu0 0.0
    %1027 = vmatpush1.xpose.msra.mxu0 %v1017
    %1028 = vmatprep.subr.mxu0 0.0
    %1029 = vmatpush1.xpose.msra.mxu0 %v1020
    %1030 = vmatprep.subr.mxu0 0.0
    %1031 = vmatpush1.xpose.msra.mxu0 0.0
    %1032 = vmatprep.subr.mxu0 0.0
    %1033 = vmatpush1.xpose.msra.mxu0 0.0
    %1034 = vmatprep.subr.mxu0 0.0
    %1035 = vmatpush1.xpose.msra.mxu0 0.0
    %1036 = vmatprep.subr.mxu0 0.0
    %1037 = vmatpush1.xpose.msra.mxu0 0.0
    %1038 = vmatprep.subr.mxu0 0.0
    %1039 = vmatpush1.xpose.msra.mxu0 0.0
    %1040 = vmatprep.subr.mxu0 0.0
    %1041 = vmatpush1.xpose.msra.mxu0 0.0
    %1042 = vmatprep.subr.mxu0 0.0
    %1043 = vmatpush1.xpose.msra.mxu0 0.0
    %1044 = vmatprep.subr.mxu0 0.0
    %1045 = vmatpush1.xpose.msra.mxu0 0.0
    %1046 = vmatprep.subr.mxu0 0.0
    %1047 = vmatpush1.xpose.msra.mxu0 0.0
    %1048 = vmatprep.subr.mxu0 0.0
    %1049 = vmatpush1.xpose.msra.mxu0 0.0
    %1050 = vmatprep.subr.mxu0 0.0
    %1051 = vmatpush1.xpose.msra.mxu0 0.0
    %1052 = vmatprep.subr.mxu0 0.0
    %1053 = vmatpush1.xpose.msra.mxu0 0.0
    %1054 = vmatprep.subr.mxu0 0.0
    %1055 = vmatpush1.xpose.msra.mxu0 0.0
    %1056 = vmatprep.subr.mxu0 0.0
    %1057 = vmatpush1.xpose.msra.mxu0 0.0
    %1058 = vmatprep.subr.mxu0 0.0
    %1059 = vmatpush1.xpose.msra.mxu0 0.0
    %1060 = vmatprep.subr.mxu0 0.0
    %1061 = vmatpush1.xpose.msra.mxu0 0.0
    %1062 = vmatprep.subr.mxu0 0.0
    %1063 = vmatpush1.xpose.msra.mxu0 0.0
    %1064 = vmatprep.subr.mxu0 0.0
    %1065 = vmatpush1.xpose.msra.mxu0 0.0
    %1066 = vmatprep.subr.mxu0 0.0
    %1067 = vmatpush1.xpose.msra.mxu0 0.0
    %1068 = vmatprep.subr.mxu0 0.0
    %1069 = vmatpush1.xpose.msra.mxu0 0.0
    %1070 = vmatprep.subr.mxu0 0.0
    %1071 = vmatpush1.xpose.msra.mxu0 0.0
    %1072 = vmatprep.subr.mxu0 0.0
    %1073 = vmatpush1.xpose.msra.mxu0 0.0
    %1074 = vmatprep.subr.mxu0 0.0
    %1075 = vmatpush1.xpose.msra.mxu0 0.0
    %1076 = vmatprep.subr.mxu0 0.0
    %1077 = vmatpush1.xpose.msra.mxu0 0.0
    %1078 = vmatprep.subr.mxu0 0.0
    %1079 = vmatpush1.xpose.msra.mxu0 0.0
    %1080 = vmatprep.subr.mxu0 0.0
    %1081 = vmatpush1.xpose.msra.mxu0 0.0
    %1082 = vmatprep.subr.mxu0 0.0
    %1083 = vmatpush1.xpose.msra.mxu0 0.0
    %1084 = vmatprep.subr.mxu0 0.0
    %1085 = vmatpush1.xpose.msra.mxu0 0.0
    %1086 = vmatprep.mubr.f32.mxu0 0.0
    %1087 = vmatmul.mubr.f32.gmra.mrb[0].mxu0 %v1008
    %v1088 = vpop.f32.mrb[0].mxu0
    %v1089 = vadd.f32 0.0, %v1088
    %v1090 = vpop.f32.mrb[0].mxu0
    %1091 = vdwg.mxu0
    %v1092 = vmul.f32 %v1089, 0.35355338
    %v1093 = vmul.f32 %v1000, %v21
    %v1094 = vmul.f32 %v1000, %v22
    %v1095 = vmul.f32 %v1000, %v23
    %v1096 = vmul.f32 %v1000, %v24
    %v1098 = vsel %vm25, %v64, 0
    %v1101 = vsel %vm25, %v1093, 0
    %v1104 = vsel %vm25, %v1094, 0
    %v1107 = vsel %vm25, %v1095, 0
    %v1110 = vsel %vm25, %v1096, 0
    %1112 = vmatprep.subr.mxu0 0.0
    %1113 = vmatpush1.xpose.msra.mxu0 %v1101
    %1114 = vmatprep.subr.mxu0 0.0
    %1115 = vmatpush1.xpose.msra.mxu0 %v1104
    %1116 = vmatprep.subr.mxu0 0.0
    %1117 = vmatpush1.xpose.msra.mxu0 %v1107
    %1118 = vmatprep.subr.mxu0 0.0
    %1119 = vmatpush1.xpose.msra.mxu0 %v1110
    %1120 = vmatprep.subr.mxu0 0.0
    %1121 = vmatpush1.xpose.msra.mxu0 0.0
    %1122 = vmatprep.subr.mxu0 0.0
    %1123 = vmatpush1.xpose.msra.mxu0 0.0
    %1124 = vmatprep.subr.mxu0 0.0
    %1125 = vmatpush1.xpose.msra.mxu0 0.0
    %1126 = vmatprep.subr.mxu0 0.0
    %1127 = vmatpush1.xpose.msra.mxu0 0.0
    %1128 = vmatprep.subr.mxu0 0.0
    %1129 = vmatpush1.xpose.msra.mxu0 0.0
    %1130 = vmatprep.subr.mxu0 0.0
    %1131 = vmatpush1.xpose.msra.mxu0 0.0
    %1132 = vmatprep.subr.mxu0 0.0
    %1133 = vmatpush1.xpose.msra.mxu0 0.0
    %1134 = vmatprep.subr.mxu0 0.0
    %1135 = vmatpush1.xpose.msra.mxu0 0.0
    %1136 = vmatprep.subr.mxu0 0.0
    %1137 = vmatpush1.xpose.msra.mxu0 0.0
    %1138 = vmatprep.subr.mxu0 0.0
    %1139 = vmatpush1.xpose.msra.mxu0 0.0
    %1140 = vmatprep.subr.mxu0 0.0
    %1141 = vmatpush1.xpose.msra.mxu0 0.0
    %1142 = vmatprep.subr.mxu0 0.0
    %1143 = vmatpush1.xpose.msra.mxu0 0.0
    %1144 = vmatprep.subr.mxu0 0.0
    %1145 = vmatpush1.xpose.msra.mxu0 0.0
    %1146 = vmatprep.subr.mxu0 0.0
    %1147 = vmatpush1.xpose.msra.mxu0 0.0
    %1148 = vmatprep.subr.mxu0 0.0
    %1149 = vmatpush1.xpose.msra.mxu0 0.0
    %1150 = vmatprep.subr.mxu0 0.0
    %1151 = vmatpush1.xpose.msra.mxu0 0.0
    %1152 = vmatprep.subr.mxu0 0.0
    %1153 = vmatpush1.xpose.msra.mxu0 0.0
    %1154 = vmatprep.subr.mxu0 0.0
    %1155 = vmatpush1.xpose.msra.mxu0 0.0
    %1156 = vmatprep.subr.mxu0 0.0
    %1157 = vmatpush1.xpose.msra.mxu0 0.0
    %1158 = vmatprep.subr.mxu0 0.0
    %1159 = vmatpush1.xpose.msra.mxu0 0.0
    %1160 = vmatprep.subr.mxu0 0.0
    %1161 = vmatpush1.xpose.msra.mxu0 0.0
    %1162 = vmatprep.subr.mxu0 0.0
    %1163 = vmatpush1.xpose.msra.mxu0 0.0
    %1164 = vmatprep.subr.mxu0 0.0
    %1165 = vmatpush1.xpose.msra.mxu0 0.0
    %1166 = vmatprep.subr.mxu0 0.0
    %1167 = vmatpush1.xpose.msra.mxu0 0.0
    %1168 = vmatprep.subr.mxu0 0.0
    %1169 = vmatpush1.xpose.msra.mxu0 0.0
    %1170 = vmatprep.subr.mxu0 0.0
    %1171 = vmatpush1.xpose.msra.mxu0 0.0
    %1172 = vmatprep.subr.mxu0 0.0
    %1173 = vmatpush1.xpose.msra.mxu0 0.0
    %1174 = vmatprep.subr.mxu0 0.0
    %1175 = vmatpush1.xpose.msra.mxu0 0.0
    %1176 = vmatprep.mubr.f32.mxu0 0.0
    %1177 = vmatmul.mubr.f32.gmra.mrb[0].mxu0 %v1098
    %v1178 = vpop.f32.mrb[0].mxu0
    %v1179 = vadd.f32 0.0, %v1178
    %v1180 = vpop.f32.mrb[0].mxu0
    %1181 = vdwg.mxu0
    %v1182 = vmul.f32 %v1179, 0.35355338
    %v1183 = vsel %vm25, %v1092, -inf
    %1184 = vmax.xlane.f32.xlu0 %v1183
    %v1185 = vpop.xlane.xlu0 %1184
    %v1186 = vsel %vm25, %v1182, -inf
    %1187 = vmax.xlane.f32.xlu0 %v1186
    %v1188 = vpop.xlane.xlu0 %1187
    %v1189 = vsub.f32 %v1092, %v1185
    %v1190 = vsub.f32 %v1182, %v1188
    %v1191 = vmul.f32 %v1189, 1.442695
    %v1192 = vpow.pop %v1191
    %v1193 = vmul.f32 %v1190, 1.442695
    %v1194 = vpow.pop %v1193
    %v1196 = vsel %vm25, %v1192, 0
    %v1199 = vsel %vm25, %v1194, 0
    %1201 = vmatprep.subr.mxu0 0.0
    %1202 = vmatpush1.msra.mxu0 %v21
    %1203 = vmatprep.subr.mxu0 0.0
    %1204 = vmatpush1.msra.mxu0 %v22
    %1205 = vmatprep.subr.mxu0 0.0
    %1206 = vmatpush1.msra.mxu0 %v23
    %1207 = vmatprep.subr.mxu0 0.0
    %1208 = vmatpush1.msra.mxu0 %v24
    %1209 = vmatprep.subr.mxu0 0.0
    %1210 = vmatpush1.msra.mxu0 0.0
    %1211 = vmatprep.subr.mxu0 0.0
    %1212 = vmatpush1.msra.mxu0 0.0
    %1213 = vmatprep.subr.mxu0 0.0
    %1214 = vmatpush1.msra.mxu0 0.0
    %1215 = vmatprep.subr.mxu0 0.0
    %1216 = vmatpush1.msra.mxu0 0.0
    %1217 = vmatprep.subr.mxu0 0.0
    %1218 = vmatpush1.msra.mxu0 0.0
    %1219 = vmatprep.subr.mxu0 0.0
    %1220 = vmatpush1.msra.mxu0 0.0
    %1221 = vmatprep.subr.mxu0 0.0
    %1222 = vmatpush1.msra.mxu0 0.0
    %1223 = vmatprep.subr.mxu0 0.0
    %1224 = vmatpush1.msra.mxu0 0.0
    %1225 = vmatprep.subr.mxu0 0.0
    %1226 = vmatpush1.msra.mxu0 0.0
    %1227 = vmatprep.subr.mxu0 0.0
    %1228 = vmatpush1.msra.mxu0 0.0
    %1229 = vmatprep.subr.mxu0 0.0
    %1230 = vmatpush1.msra.mxu0 0.0
    %1231 = vmatprep.subr.mxu0 0.0
    %1232 = vmatpush1.msra.mxu0 0.0
    %1233 = vmatprep.subr.mxu0 0.0
    %1234 = vmatpush1.msra.mxu0 0.0
    %1235 = vmatprep.subr.mxu0 0.0
    %1236 = vmatpush1.msra.mxu0 0.0
    %1237 = vmatprep.subr.mxu0 0.0
    %1238 = vmatpush1.msra.mxu0 0.0
    %1239 = vmatprep.subr.mxu0 0.0
    %1240 = vmatpush1.msra.mxu0 0.0
    %1241 = vmatprep.subr.mxu0 0.0
    %1242 = vmatpush1.msra.mxu0 0.0
    %1243 = vmatprep.subr.mxu0 0.0
    %1244 = vmatpush1.msra.mxu0 0.0
    %1245 = vmatprep.subr.mxu0 0.0
    %1246 = vmatpush1.msra.mxu0 0.0
    %1247 = vmatprep.subr.mxu0 0.0
    %1248 = vmatpush1.msra.mxu0 0.0
    %1249 = vmatprep.subr.mxu0 0.0
    %1250 = vmatpush1.msra.mxu0 0.0
    %1251 = vmatprep.subr.mxu0 0.0
    %1252 = vmatpush1.msra.mxu0 0.0
    %1253 = vmatprep.subr.mxu0 0.0
    %1254 = vmatpush1.msra.mxu0 0.0
    %1255 = vmatprep.subr.mxu0 0.0
    %1256 = vmatpush1.msra.mxu0 0.0
    %1257 = vmatprep.subr.mxu0 0.0
    %1258 = vmatpush1.msra.mxu0 0.0
    %1259 = vmatprep.subr.mxu0 0.0
    %1260 = vmatpush1.msra.mxu0 0.0
    %1261 = vmatprep.subr.mxu0 0.0
    %1262 = vmatpush1.msra.mxu0 0.0
    %1263 = vmatprep.subr.mxu0 0.0
    %1264 = vmatpush1.msra.mxu0 0.0
    %1265 = vmatprep.mubr.f32.mxu0 0.0
    %1266 = vmatmul.mubr.f32.gmra.mrb[0].mxu0 %v1196
    %v1267 = vpop.f32.mrb[0].mxu0
    %v1268 = vadd.f32 0.0, %v1267
    %v1269 = vpop.f32.mrb[0].mxu0
    %1270 = vmatprep.mubr.f32.mxu0 0.0
    %1271 = vmatmul.mubr.f32.gmra.mrb[0].mxu0 %v1199
    %v1272 = vpop.f32.mrb[0].mxu0
    %v1273 = vadd.f32 0.0, %v1272
    %v1274 = vpop.f32.mrb[0].mxu0
    %1275 = vdwg.mxu0
    %v1276 = vrcp.pop %v1268
    %v1277 = vrcp.pop %v1273
    %v1278 = vmul.f32 %v1192, %v1276
    %v1279 = vmul.f32 %v1194, %v1277
    %v1280 = vmul.f32 %v1001, %v21
    %v1281 = vmul.f32 %v1001, %v22
    %v1282 = vmul.f32 %v1001, %v23
    %v1283 = vmul.f32 %v1001, %v24
    %v1285 = vsel %vm25, %v1278, 0
    %1287 = vmatprep.subr.mxu0 0.0
    %1288 = vmatpush1.msra.mxu0 %v1280
    %1289 = vmatprep.subr.mxu0 0.0
    %1290 = vmatpush1.msra.mxu0 %v1281
    %1291 = vmatprep.subr.mxu0 0.0
    %1292 = vmatpush1.msra.mxu0 %v1282
    %1293 = vmatprep.subr.mxu0 0.0
    %1294 = vmatpush1.msra.mxu0 %v1283
    %1295 = vmatprep.subr.mxu0 0.0
    %1296 = vmatpush1.msra.mxu0 0.0
    %1297 = vmatprep.subr.mxu0 0.0
    %1298 = vmatpush1.msra.mxu0 0.0
    %1299 = vmatprep.subr.mxu0 0.0
    %1300 = vmatpush1.msra.mxu0 0.0
    %1301 = vmatprep.subr.mxu0 0.0
    %1302 = vmatpush1.msra.mxu0 0.0
    %1303 = vmatprep.subr.mxu0 0.0
    %1304 = vmatpush1.msra.mxu0 0.0
    %1305 = vmatprep.subr.mxu0 0.0
    %1306 = vmatpush1.msra.mxu0 0.0
    %1307 = vmatprep.subr.mxu0 0.0
    %1308 = vmatpush1.msra.mxu0 0.0
    %1309 = vmatprep.subr.mxu0 0.0
    %1310 = vmatpush1.msra.mxu0 0.0
    %1311 = vmatprep.subr.mxu0 0.0
    %1312 = vmatpush1.msra.mxu0 0.0
    %1313 = vmatprep.subr.mxu0 0.0
    %1314 = vmatpush1.msra.mxu0 0.0
    %1315 = vmatprep.subr.mxu0 0.0
    %1316 = vmatpush1.msra.mxu0 0.0
    %1317 = vmatprep.subr.mxu0 0.0
    %1318 = vmatpush1.msra.mxu0 0.0
    %1319 = vmatprep.subr.mxu0 0.0
    %1320 = vmatpush1.msra.mxu0 0.0
    %1321 = vmatprep.subr.mxu0 0.0
    %1322 = vmatpush1.msra.mxu0 0.0
    %1323 = vmatprep.subr.mxu0 0.0
    %1324 = vmatpush1.msra.mxu0 0.0
    %1325 = vmatprep.subr.mxu0 0.0
    %1326 = vmatpush1.msra.mxu0 0.0
    %1327 = vmatprep.subr.mxu0 0.0
    %1328 = vmatpush1.msra.mxu0 0.0
    %1329 = vmatprep.subr.mxu0 0.0
    %1330 = vmatpush1.msra.mxu0 0.0
    %1331 = vmatprep.subr.mxu0 0.0
    %1332 = vmatpush1.msra.mxu0 0.0
    %1333 = vmatprep.subr.mxu0 0.0
    %1334 = vmatpush1.msra.mxu0 0.0
    %1335 = vmatprep.subr.mxu0 0.0
    %1336 = vmatpush1.msra.mxu0 0.0
    %1337 = vmatprep.subr.mxu0 0.0
    %1338 = vmatpush1.msra.mxu0 0.0
    %1339 = vmatprep.subr.mxu0 0.0
    %1340 = vmatpush1.msra.mxu0 0.0
    %1341 = vmatprep.subr.mxu0 0.0
    %1342 = vmatpush1.msra.mxu0 0.0
    %1343 = vmatprep.subr.mxu0 0.0
    %1344 = vmatpush1.msra.mxu0 0.0
    %1345 = vmatprep.subr.mxu0 0.0
    %1346 = vmatpush1.msra.mxu0 0.0
    %1347 = vmatprep.subr.mxu0 0.0
    %1348 = vmatpush1.msra.mxu0 0.0
    %1349 = vmatprep.subr.mxu0 0.0
    %1350 = vmatpush1.msra.mxu0 0.0
    %1351 = vmatprep.mubr.f32.mxu0 0.0
    %1352 = vmatmul.mubr.f32.gmra.mrb[0].mxu0 %v1285
    %v1353 = vpop.f32.mrb[0].mxu0
    %v1354 = vadd.f32 0.0, %v1353
    %v1355 = vpop.f32.mrb[0].mxu0
    %1356 = vdwg.mxu0
    %v1357 = vmul.f32 %v1002, %v21
    %v1358 = vmul.f32 %v1002, %v22
    %v1359 = vmul.f32 %v1002, %v23
    %v1360 = vmul.f32 %v1002, %v24
    %v1362 = vsel %vm25, %v1279, 0
    %1364 = vmatprep.subr.mxu0 0.0
    %1365 = vmatpush1.msra.mxu0 %v1357
    %1366 = vmatprep.subr.mxu0 0.0
    %1367 = vmatpush1.msra.mxu0 %v1358
    %1368 = vmatprep.subr.mxu0 0.0
    %1369 = vmatpush1.msra.mxu0 %v1359
    %1370 = vmatprep.subr.mxu0 0.0
    %1371 = vmatpush1.msra.mxu0 %v1360
    %1372 = vmatprep.subr.mxu0 0.0
    %1373 = vmatpush1.msra.mxu0 0.0
    %1374 = vmatprep.subr.mxu0 0.0
    %1375 = vmatpush1.msra.mxu0 0.0
    %1376 = vmatprep.subr.mxu0 0.0
    %1377 = vmatpush1.msra.mxu0 0.0
    %1378 = vmatprep.subr.mxu0 0.0
    %1379 = vmatpush1.msra.mxu0 0.0
    %1380 = vmatprep.subr.mxu0 0.0
    %1381 = vmatpush1.msra.mxu0 0.0
    %1382 = vmatprep.subr.mxu0 0.0
    %1383 = vmatpush1.msra.mxu0 0.0
    %1384 = vmatprep.subr.mxu0 0.0
    %1385 = vmatpush1.msra.mxu0 0.0
    %1386 = vmatprep.subr.mxu0 0.0
    %1387 = vmatpush1.msra.mxu0 0.0
    %1388 = vmatprep.subr.mxu0 0.0
    %1389 = vmatpush1.msra.mxu0 0.0
    %1390 = vmatprep.subr.mxu0 0.0
    %1391 = vmatpush1.msra.mxu0 0.0
    %1392 = vmatprep.subr.mxu0 0.0
    %1393 = vmatpush1.msra.mxu0 0.0
    %1394 = vmatprep.subr.mxu0 0.0
    %1395 = vmatpush1.msra.mxu0 0.0
    %1396 = vmatprep.subr.mxu0 0.0
    %1397 = vmatpush1.msra.mxu0 0.0
    %1398 = vmatprep.subr.mxu0 0.0
    %1399 = vmatpush1.msra.mxu0 0.0
    %1400 = vmatprep.subr.mxu0 0.0
    %1401 = vmatpush1.msra.mxu0 0.0
    %1402 = vmatprep.subr.mxu0 0.0
    %1403 = vmatpush1.msra.mxu0 0.0
    %1404 = vmatprep.subr.mxu0 0.0
    %1405 = vmatpush1.msra.mxu0 0.0
    %1406 = vmatprep.subr.mxu0 0.0
    %1407 = vmatpush1.msra.mxu0 0.0
    %1408 = vmatprep.subr.mxu0 0.0
    %1409 = vmatpush1.msra.mxu0 0.0
    %1410 = vmatprep.subr.mxu0 0.0
    %1411 = vmatpush1.msra.mxu0 0.0
    %1412 = vmatprep.subr.mxu0 0.0
    %1413 = vmatpush1.msra.mxu0 0.0
    %1414 = vmatprep.subr.mxu0 0.0
    %1415 = vmatpush1.msra.mxu0 0.0
    %1416 = vmatprep.subr.mxu0 0.0
    %1417 = vmatpush1.msra.mxu0 0.0
    %1418 = vmatprep.subr.mxu0 0.0
    %1419 = vmatpush1.msra.mxu0 0.0
    %1420 = vmatprep.subr.mxu0 0.0
    %1421 = vmatpush1.msra.mxu0 0.0
    %1422 = vmatprep.subr.mxu0 0.0
    %1423 = vmatpush1.msra.mxu0 0.0
    %1424 = vmatprep.subr.mxu0 0.0
    %1425 = vmatpush1.msra.mxu0 0.0
    %1426 = vmatprep.subr.mxu0 0.0
    %1427 = vmatpush1.msra.mxu0 0.0
    %1428 = vmatprep.mubr.f32.mxu0 0.0
    %1429 = vmatmul.mubr.f32.gmra.mrb[0].mxu0 %v1362
    %v1430 = vpop.f32.mrb[0].mxu0
    %v1431 = vadd.f32 0.0, %v1430
    %v1432 = vpop.f32.mrb[0].mxu0
    %1433 = vdwg.mxu0
    %v1434 = vld [vmem:[%s1 + $0x110] sm:$0xff]
    %v1435 = vld [vmem:[%s1 + $0x118] sm:$0xff]
    %v1436 = vld [vmem:[%s1 + $0x120] sm:$0xff]
    %v1437 = vld [vmem:[%s1 + $0x128] sm:$0xff]
    %v1438 = vlaneseq
    %v1439 = vshrl.u32 %v1438, 7
    %v1440 = vsub.s32 0, %v1439
    %v1441 = vrot.slane %v20, %v1440
    %v1443 = vsel %vm25, %v1354, 0
    %v1446 = vsel %vm25, %v1431, 0
    %1448 = vmatprep.subr.mxu0 0.0
    %1449 = vmatpush1.msra.mxu0 %v1434
    %1450 = vmatprep.subr.mxu0 0.0
    %1451 = vmatpush1.msra.mxu0 %v1435
    %1452 = vmatprep.subr.mxu0 0.0
    %1453 = vmatpush1.msra.mxu0 %v1436
    %1454 = vmatprep.subr.mxu0 0.0
    %1455 = vmatpush1.msra.mxu0 %v1437
    %1456 = vmatprep.subr.mxu0 0.0
    %1457 = vmatpush1.msra.mxu0 0.0
    %1458 = vmatprep.subr.mxu0 0.0
    %1459 = vmatpush1.msra.mxu0 0.0
    %1460 = vmatprep.subr.mxu0 0.0
    %1461 = vmatpush1.msra.mxu0 0.0
    %1462 = vmatprep.subr.mxu0 0.0
    %1463 = vmatpush1.msra.mxu0 0.0
    %1464 = vmatprep.subr.mxu0 0.0
    %1465 = vmatpush1.msra.mxu0 0.0
    %1466 = vmatprep.subr.mxu0 0.0
    %1467 = vmatpush1.msra.mxu0 0.0
    %1468 = vmatprep.subr.mxu0 0.0
    %1469 = vmatpush1.msra.mxu0 0.0
    %1470 = vmatprep.subr.mxu0 0.0
    %1471 = vmatpush1.msra.mxu0 0.0
    %1472 = vmatprep.subr.mxu0 0.0
    %1473 = vmatpush1.msra.mxu0 0.0
    %1474 = vmatprep.subr.mxu0 0.0
    %1475 = vmatpush1.msra.mxu0 0.0
    %1476 = vmatprep.subr.mxu0 0.0
    %1477 = vmatpush1.msra.mxu0 0.0
    %1478 = vmatprep.subr.mxu0 0.0
    %1479 = vmatpush1.msra.mxu0 0.0
    %1480 = vmatprep.subr.mxu0 0.0
    %1481 = vmatpush1.msra.mxu0 0.0
    %1482 = vmatprep.subr.mxu0 0.0
    %1483 = vmatpush1.msra.mxu0 0.0
    %1484 = vmatprep.subr.mxu0 0.0
    %1485 = vmatpush1.msra.mxu0 0.0
    %1486 = vmatprep.subr.mxu0 0.0
    %1487 = vmatpush1.msra.mxu0 0.0
    %1488 = vmatprep.subr.mxu0 0.0
    %1489 = vmatpush1.msra.mxu0 0.0
    %1490 = vmatprep.subr.mxu0 0.0
    %1491 = vmatpush1.msra.mxu0 0.0
    %1492 = vmatprep.subr.mxu0 0.0
    %1493 = vmatpush1.msra.mxu0 0.0
    %1494 = vmatprep.subr.mxu0 0.0
    %1495 = vmatpush1.msra.mxu0 0.0
    %1496 = vmatprep.subr.mxu0 0.0
    %1497 = vmatpush1.msra.mxu0 0.0
    %1498 = vmatprep.subr.mxu0 0.0
    %1499 = vmatpush1.msra.mxu0 0.0
    %1500 = vmatprep.subr.mxu0 0.0
    %1501 = vmatpush1.msra.mxu0 0.0
    %1502 = vmatprep.subr.mxu0 0.0
    %1503 = vmatpush1.msra.mxu0 0.0
    %1504 = vmatprep.subr.mxu0 0.0
    %1505 = vmatpush1.msra.mxu0 0.0
    %1506 = vmatprep.subr.mxu0 0.0
    %1507 = vmatpush1.msra.mxu0 0.0
    %1508 = vmatprep.subr.mxu0 0.0
    %1509 = vmatpush1.msra.mxu0 0.0
    %1510 = vmatprep.subr.mxu0 0.0
    %1511 = vmatpush1.msra.mxu0 0.0
    %1512 = vmatprep.mubr.f32.mxu0 0.0
    %1513 = vmatmul.mubr.f32.gmra.mrb[0].mxu0 %v1443
    %v1514 = vpop.f32.mrb[0].mxu0
    %v1515 = vadd.f32 %v1441, %v1514
    %v1516 = vpop.f32.mrb[0].mxu0
    %1517 = vmatprep.mubr.f32.mxu0 0.0
    %1518 = vmatmul.mubr.f32.gmra.mrb[0].mxu0 %v1446
    %v1519 = vpop.f32.mrb[0].mxu0
    %v1520 = vadd.f32 %v1441, %v1519
    %v1521 = vpop.f32.mrb[0].mxu0
    %1522 = vdwg.mxu0
    %v1523 = vadd.f32 %v1515, %v12
    %v1524 = vadd.f32 %v1520, %v13
    %1525 = vst.msk [vmem:[#allocation2] sm:$0xff] %vm25, %v1523
    %1526 = vst.msk [vmem:[#allocation2 + $0x8] sm:$0xff] %vm25, %v1524
    // Predicated region
    $region10: #{tpu_custom_call.1} parent=1 // pred_check
      _
    $region11: #{tpu_custom_call.1} parent=1 // pred_check_branch
      %1528 = sbr.rel (0) target = $region13
    $region12: #{tpu_custom_call.1} parent=1 // pred_region
      %s1530 = ssub.s32 256, 256
      %1531 = vsyncadd [#allocation3], %s1530
      %s1532 = sshll.u32 [#allocation2], 4
      %s1533 = int_to_ptr.vmem [resolvable:$true] %s1532
      %1538 = dma.vmem_to_hbm [thread:$0]  %s1533, 256, %s2, [#allocation3], 128, 128, 8
    $region13: #{tpu_custom_call.1} parent=1 // pred_fallthru
      _
    // Predicated region
    $region14: #{tpu_custom_call.1} parent=1 // pred_check
      _
    $region15: #{tpu_custom_call.1} parent=1 // pred_check_branch
      %1540 = sbr.rel (0) target = $region17
    $region16: #{tpu_custom_call.1} parent=1 // pred_region
      %1541 = dma.done [#allocation3], 256
    $region17: #{tpu_custom_call.1} parent=1 // pred_fallthru
      _
    %1542 = vsyncpa [#allocation3], 1

</llo_original>
